<compile_context>
chip_gen: v5e
topology: v5e:2x2
jax: 0.10.0
libtpu: 0.0.40
codegen_flags: <defaults>
</compile_context>

<pallas_src>
import jax
import jax.numpy as jnp
from jax.experimental import pallas as pl
from jax.experimental.pallas import tpu as pltpu


def _round_up(x, m):
    return ((x + m - 1) // m) * m


def _cdiv(a, b):
    return -(-a // b)


def _weight_spec(shape):
    """BlockSpec for an operand whose block never changes across the grid.
    Single-buffered when the running JAX supports pipeline_mode."""
    index_map = lambda n, i: (0,) * len(shape)
    try:
        return pl.BlockSpec(shape, index_map, pipeline_mode=pl.Buffered(1))
    except (TypeError, AttributeError):   # older JAX without pipeline_mode
        return pl.BlockSpec(shape, index_map)


def _choose_row_tile(HW, N, max_tile):
    """Divisor-aware spatial tile: either the full HW (single lane-dense block,
    no padding) or a multiple of 128 chosen so total padding stays below one
    tile.  When N == 1 force >= 2 row tiles so both v7x TensorCores get work."""
    min_tiles = 2 if (N == 1 and HW >= 256) else 1
    if HW <= max_tile and min_tiles == 1:
        return HW, HW
    n_tiles = max(min_tiles, _cdiv(HW, max_tile))
    tile = _round_up(_cdiv(HW, n_tiles), 128)
    return tile, tile * n_tiles


def _fcomb_kernel(x_ref, zc_ref, w0t_ref, *refs):
    """Fused 1x1-conv chain on one (Cf, tile) NCHW column-block of one image.

    refs = (w1t, b1, ..., w_{L-1}t, b_{L-1}, out_ref); weights arrive
    pre-transposed as (C_out, C_in) so every layer is h = W^T @ h.

    layer 0      : h = W0_feat^T @ x_feat (bf16 in, f32 acc) + (W0_z^T z + b0)
                   (the z / bias part arrives precomputed per image in zc_ref)
    layers 1..L-2: ReLU then matmul + bias
    layer  L-1   : ReLU then matmul + bias, no trailing ReLU  (last_layer)
    """
    out_ref = refs[-1]
    wb = refs[:-1]
    n_rest = len(wb) // 2

    x = x_ref[0].astype(w0t_ref.dtype)                 # (Cf, tile) f32 -> bf16
    h = jnp.dot(w0t_ref[...], x, preferred_element_type=jnp.float32)  # (C1, tile)
    h = h + zc_ref[0]                                  # (C1, 1) f32 broadcast

    for i in range(n_rest):
        h = jnp.maximum(h, 0.0)                        # ReLU after previous conv
        wv = wb[2 * i][...]                            # (C_out, C_in) bf16
        bv = wb[2 * i + 1][...]                        # (C_out, 1)    f32
        h = jnp.dot(wv, h.astype(wv.dtype),
                    preferred_element_type=jnp.float32) + bv

    out_ref[0] = h.astype(out_ref.dtype)


def fcomb_forward(feature_map, z, params, *, max_row_tile=2048,
                  compute_dtype=jnp.bfloat16, out_dtype=jnp.float32):
    """feature_map: (N, C_feat, H, W) NCHW f32; z: (N, latent_dim) f32.

    params: list of (w, b) with w: (C_in, C_out), b: (C_out,). The first w has
    C_in = C_feat + latent_dim (concat order: features first, then z).
    Returns (N, C_out_last, H, W) NCHW, same layout as the PyTorch module.
    """
    N, Cf, H, W = feature_map.shape
    L = z.shape[1]
    w0, b0 = params[0]
    assert w0.shape[0] == Cf + L, "first conv expects concat(feature, z) channels"
    C1 = w0.shape[1]
    Cout = params[-1][0].shape[1]

    HW = H * W
    tile, HW_pad = _choose_row_tile(HW, N, max_row_tile)

    # NCHW -> (N, Cf, HW) is a contiguous reshape: no data movement.
    fm = feature_map.reshape(N, Cf, HW)
    if HW_pad != HW:
        fm = jnp.pad(fm, ((0, 0), (0, 0), (0, HW_pad - HW)))

    # z contribution of the first conv, folded with its bias (tiny, f32).
    w0_feat = w0[:Cf, :]
    w0_z = w0[Cf:, :]
    zc = (z.astype(jnp.float32) @ w0_z.astype(jnp.float32)
          + b0.astype(jnp.float32)).reshape(N, C1, 1)

    # Pre-transpose + cast the weights once (tiny, one-time).
    w0t = jnp.transpose(w0_feat).astype(compute_dtype)            # (C1, Cf)

    flat = [fm, zc, w0t]
    in_specs = [
        pl.BlockSpec((1, Cf, tile), lambda n, i: (n, 0, i)),
        pl.BlockSpec((1, C1, 1), lambda n, i: (n, 0, 0)),
        _weight_spec((C1, Cf)),
    ]
    for w, b in params[1:]:
        wt = jnp.transpose(w).astype(compute_dtype)               # (C_out, C_in)
        bc = b.astype(jnp.float32).reshape(-1, 1)                 # (C_out, 1)
        flat += [wt, bc]
        in_specs += [_weight_spec(wt.shape), _weight_spec(bc.shape)]

    itemsize = lambda d: int(jnp.dtype(d).itemsize)
    weight_bytes = sum(int(a.size) * a.dtype.itemsize for a in flat[2:])
    # VMEM budget from the actual footprint; cap well inside v7x's 64 MiB.
    est = (2 * Cf * tile * itemsize(feature_map.dtype)     # dbl-buffered input
           + 2 * Cout * tile * itemsize(out_dtype)         # dbl-buffered output
           + 2 * max(C1, Cout) * tile * 4                  # f32 intermediates
           + 2 * weight_bytes + (2 << 20))
    vmem_limit = int(min(56 << 20, max(32 << 20, est)))

    flops = 2 * N * HW_pad * (Cf * C1 + sum(
        int(w.shape[0]) * int(w.shape[1]) for w, _ in params[1:]))
    bytes_accessed = (int(fm.size) * fm.dtype.itemsize
                      + N * HW_pad * Cout * itemsize(out_dtype)
                      + weight_bytes + int(zc.size) * 4)

    out = pl.pallas_call(
        _fcomb_kernel,
        out_shape=jax.ShapeDtypeStruct((N, Cout, HW_pad), out_dtype),
        grid_spec=pltpu.PrefetchScalarGridSpec(
            num_scalar_prefetch=0,
            grid=(N, HW_pad // tile),
            in_specs=in_specs,
            out_specs=pl.BlockSpec((1, Cout, tile), lambda n, i: (n, 0, i)),
        ),
        compiler_params=pltpu.CompilerParams(
            dimension_semantics=("parallel", "parallel"),
            vmem_limit_bytes=vmem_limit,
        ),
        cost_estimate=pl.CostEstimate(
            flops=flops, transcendentals=0, bytes_accessed=bytes_accessed),
    )(*flat)

    if HW_pad != HW:
        out = out[:, :, :HW]
    return out.reshape(N, Cout, H, W)          # already NCHW; trivial reshape


def init_fcomb_params(key, no_convs_fcomb):
    """Deterministic synthetic init. Conv2d 1x1 weights (C_out, C_in, 1, 1) are
    stored as (C_in, C_out); the wrapper transposes them once for the kernel."""
    dims = [512] + [256] * no_convs_fcomb
    params = []
    for i in range(no_convs_fcomb):
        key, kw, kb = jax.random.split(key, 3)
        w = 0.05 * jax.random.normal(kw, (dims[i], dims[i + 1]), jnp.float32)
        b = 0.01 * jax.random.normal(kb, (dims[i + 1],), jnp.float32)
        params.append((w, b))
    return params


def _reference_forward(feature_map, z, params, compute_dtype=jnp.float32):
    """Pure-JAX reference of the module math (dot inputs cast to compute_dtype,
    f32 accumulation) for sanity checks at matching / full precision."""
    N, Cf, H, W = feature_map.shape
    L = z.shape[1]
    fm = jnp.transpose(feature_map, (0, 2, 3, 1))
    zb = jnp.broadcast_to(z[:, None, None, :], (N, H, W, L))
    h = jnp.concatenate([fm, zb], axis=-1).reshape(N * H * W, Cf + L)
    for i, (w, b) in enumerate(params):
        h = jnp.dot(h.astype(compute_dtype), w.astype(compute_dtype),
                    preferred_element_type=jnp.float32) + b.astype(jnp.float32)
        if i < len(params) - 1:
            h = jnp.maximum(h, 0.0)
    return jnp.transpose(h.reshape(N, H, W, -1), (0, 3, 1, 2))


if __name__ == "__main__":
    # Small, module-consistent shapes: concat channels must equal 512.
    N, H, W = 2, 8, 8
    latent_dim = 6
    c_feat = 512 - latent_dim          # 506
    no_convs_fcomb = 4                 # -> 4 one-by-one convs total

    key = jax.random.PRNGKey(0)
    k_fm, k_z, k_p = jax.random.split(key, 3)
    feature_map = jax.random.normal(k_fm, (N, c_feat, H, W), jnp.float32)
    z = jax.random.normal(k_z, (N, latent_dim), jnp.float32)
    params = init_fcomb_params(k_p, no_convs_fcomb)

    fcomb = jax.jit(lambda f, zz, p: fcomb_forward(f, zz, p))
    out = jax.block_until_ready(fcomb(feature_map, z, params))
    assert out.shape == (N, 256, H, W), out.shape
    assert out.dtype == jnp.float32, out.dtype

    # Matching-precision reference (bf16 dot inputs, f32 accumulation).
    ref_bf16 = _reference_forward(feature_map, z, params,
                                  compute_dtype=jnp.bfloat16)
    # Full-precision reference: loose sanity bound for the bf16-compute kernel.
    ref_f32 = _reference_forward(feature_map, z, params,
                                 compute_dtype=jnp.float32)
    ref_bf16, ref_f32 = jax.block_until_ready((ref_bf16, ref_f32))

    assert jnp.allclose(out, ref_bf16, atol=3e-2, rtol=3e-2), \
        ("mismatch vs bf16-matched reference",
         float(jnp.max(jnp.abs(out - ref_bf16))))
    assert float(jnp.max(jnp.abs(out - ref_f32))) < 0.25, \
        ("kernel deviates too far from f32 reference",
         float(jnp.max(jnp.abs(out - ref_f32))))

    print("KERNEL_OK")
</pallas_src>

<mosaic_0001>
module attributes {stable_mosaic.version = 11 : i64} {
  func.func @_fcomb_kernel(%arg0: i32, %arg1: i32, %arg2: memref<1x506x64xf32, #tpu.memory_space<vmem>>, %arg3: memref<1x256x1xf32, #tpu.memory_space<vmem>>, %arg4: memref<256x506xbf16, #tpu.memory_space<vmem>>, %arg5: memref<256x256xbf16, #tpu.memory_space<vmem>>, %arg6: memref<256x1xf32, #tpu.memory_space<vmem>>, %arg7: memref<256x256xbf16, #tpu.memory_space<vmem>>, %arg8: memref<256x1xf32, #tpu.memory_space<vmem>>, %arg9: memref<256x256xbf16, #tpu.memory_space<vmem>>, %arg10: memref<256x1xf32, #tpu.memory_space<vmem>>, %arg11: memref<1x256x64xf32, #tpu.memory_space<vmem>>) attributes {dimension_semantics = [#tpu.dimension_semantics<parallel>, #tpu.dimension_semantics<parallel>], iteration_bounds = array<i64: 2, 1>, scalar_prefetch = 0 : i64, scratch_operands = 0 : i64, tpu.core_type = #tpu.core_type<tc>, window_params = [{transform_indices = @transform_0, window_bounds = array<i64: 1, 506, 64>}, {transform_indices = @transform_1, window_bounds = array<i64: 1, 256, 1>}, {pipeline_mode = #tpu.pipeline_mode<synchronous>, transform_indices = @transform_2, window_bounds = array<i64: 256, 506>}, {pipeline_mode = #tpu.pipeline_mode<synchronous>, transform_indices = @transform_3, window_bounds = array<i64: 256, 256>}, {pipeline_mode = #tpu.pipeline_mode<synchronous>, transform_indices = @transform_4, window_bounds = array<i64: 256, 1>}, {pipeline_mode = #tpu.pipeline_mode<synchronous>, transform_indices = @transform_5, window_bounds = array<i64: 256, 256>}, {pipeline_mode = #tpu.pipeline_mode<synchronous>, transform_indices = @transform_6, window_bounds = array<i64: 256, 1>}, {pipeline_mode = #tpu.pipeline_mode<synchronous>, transform_indices = @transform_7, window_bounds = array<i64: 256, 256>}, {pipeline_mode = #tpu.pipeline_mode<synchronous>, transform_indices = @transform_8, window_bounds = array<i64: 256, 1>}, {transform_indices = @transform_9, window_bounds = array<i64: 1, 256, 64>}]} {
    %c0 = arith.constant 0 : index
    %c0_0 = arith.constant 0 : index
    %c0_1 = arith.constant 0 : index
    %0 = vector.load %arg2[%c0, %c0_0, %c0_1] : memref<1x506x64xf32, #tpu.memory_space<vmem>>, vector<1x506x64xf32>
    %1 = vector.shape_cast %0 : vector<1x506x64xf32> to vector<506x64xf32>
    %2 = arith.truncf %1 : vector<506x64xf32> to vector<506x64xbf16>
    %c0_2 = arith.constant 0 : index
    %c0_3 = arith.constant 0 : index
    %3 = vector.load %arg4[%c0_2, %c0_3] : memref<256x506xbf16, #tpu.memory_space<vmem>>, vector<256x506xbf16>
    %cst = arith.constant dense<0.000000e+00> : vector<256x64xf32>
    %4 = tpu.matmul %3, %2, %cst {dimension_numbers = #tpu.dot_dimension_numbers<[1], [0], [0], [1], [0, 0, 1, 1], [], []>} : vector<256x506xbf16>, vector<506x64xbf16>, vector<256x64xf32> -> vector<256x64xf32>
    %c0_4 = arith.constant 0 : index
    %c0_5 = arith.constant 0 : index
    %c0_6 = arith.constant 0 : index
    %5 = vector.load %arg3[%c0_4, %c0_5, %c0_6] : memref<1x256x1xf32, #tpu.memory_space<vmem>>, vector<1x256x1xf32>
    %6 = vector.shape_cast %5 : vector<1x256x1xf32> to vector<256x1xf32>
    %7 = vector.broadcast %6 : vector<256x1xf32> to vector<256x64xf32>
    %8 = arith.addf %4, %7 : vector<256x64xf32>
    %cst_7 = arith.constant 0.000000e+00 : f32
    %9 = vector.broadcast %cst_7 : f32 to vector<256x64xf32>
    %10 = arith.maximumf %8, %9 : vector<256x64xf32>
    %c0_8 = arith.constant 0 : index
    %c0_9 = arith.constant 0 : index
    %11 = vector.load %arg5[%c0_8, %c0_9] : memref<256x256xbf16, #tpu.memory_space<vmem>>, vector<256x256xbf16>
    %c0_10 = arith.constant 0 : index
    %c0_11 = arith.constant 0 : index
    %12 = vector.load %arg6[%c0_10, %c0_11] : memref<256x1xf32, #tpu.memory_space<vmem>>, vector<256x1xf32>
    %13 = arith.truncf %10 : vector<256x64xf32> to vector<256x64xbf16>
    %cst_12 = arith.constant dense<0.000000e+00> : vector<256x64xf32>
    %14 = tpu.matmul %11, %13, %cst_12 {dimension_numbers = #tpu.dot_dimension_numbers<[1], [0], [0], [1], [0, 0, 1, 1], [], []>} : vector<256x256xbf16>, vector<256x64xbf16>, vector<256x64xf32> -> vector<256x64xf32>
    %15 = vector.broadcast %12 : vector<256x1xf32> to vector<256x64xf32>
    %16 = arith.addf %14, %15 : vector<256x64xf32>
    %cst_13 = arith.constant 0.000000e+00 : f32
    %17 = vector.broadcast %cst_13 : f32 to vector<256x64xf32>
    %18 = arith.maximumf %16, %17 : vector<256x64xf32>
    %c0_14 = arith.constant 0 : index
    %c0_15 = arith.constant 0 : index
    %19 = vector.load %arg7[%c0_14, %c0_15] : memref<256x256xbf16, #tpu.memory_space<vmem>>, vector<256x256xbf16>
    %c0_16 = arith.constant 0 : index
    %c0_17 = arith.constant 0 : index
    %20 = vector.load %arg8[%c0_16, %c0_17] : memref<256x1xf32, #tpu.memory_space<vmem>>, vector<256x1xf32>
    %21 = arith.truncf %18 : vector<256x64xf32> to vector<256x64xbf16>
    %cst_18 = arith.constant dense<0.000000e+00> : vector<256x64xf32>
    %22 = tpu.matmul %19, %21, %cst_18 {dimension_numbers = #tpu.dot_dimension_numbers<[1], [0], [0], [1], [0, 0, 1, 1], [], []>} : vector<256x256xbf16>, vector<256x64xbf16>, vector<256x64xf32> -> vector<256x64xf32>
    %23 = vector.broadcast %20 : vector<256x1xf32> to vector<256x64xf32>
    %24 = arith.addf %22, %23 : vector<256x64xf32>
    %cst_19 = arith.constant 0.000000e+00 : f32
    %25 = vector.broadcast %cst_19 : f32 to vector<256x64xf32>
    %26 = arith.maximumf %24, %25 : vector<256x64xf32>
    %c0_20 = arith.constant 0 : index
    %c0_21 = arith.constant 0 : index
    %27 = vector.load %arg9[%c0_20, %c0_21] : memref<256x256xbf16, #tpu.memory_space<vmem>>, vector<256x256xbf16>
    %c0_22 = arith.constant 0 : index
    %c0_23 = arith.constant 0 : index
    %28 = vector.load %arg10[%c0_22, %c0_23] : memref<256x1xf32, #tpu.memory_space<vmem>>, vector<256x1xf32>
    %29 = arith.truncf %26 : vector<256x64xf32> to vector<256x64xbf16>
    %cst_24 = arith.constant dense<0.000000e+00> : vector<256x64xf32>
    %30 = tpu.matmul %27, %29, %cst_24 {dimension_numbers = #tpu.dot_dimension_numbers<[1], [0], [0], [1], [0, 0, 1, 1], [], []>} : vector<256x256xbf16>, vector<256x64xbf16>, vector<256x64xf32> -> vector<256x64xf32>
    %31 = vector.broadcast %28 : vector<256x1xf32> to vector<256x64xf32>
    %32 = arith.addf %30, %31 : vector<256x64xf32>
    %c0_25 = arith.constant 0 : index
    %c0_26 = arith.constant 0 : index
    %c0_27 = arith.constant 0 : index
    %33 = vector.load %arg11[%c0_25, %c0_26, %c0_27] : memref<1x256x64xf32, #tpu.memory_space<vmem>>, vector<1x256x64xf32>
    %34 = vector.shape_cast %33 : vector<1x256x64xf32> to vector<256x64xf32>
    %35 = vector.shape_cast %32 : vector<256x64xf32> to vector<1x256x64xf32>
    tpu.vector_store %arg11[%c0_25, %c0_26, %c0_27], %35 {strides = array<i32>} : memref<1x256x64xf32, #tpu.memory_space<vmem>>, vector<1x256x64xf32>,
    return
  }
  func.func @transform_0(%arg0: i32, %arg1: i32) -> (i32, i32, i32) {
    %c0_i32 = arith.constant 0 : i32
    %c0_i32_0 = arith.constant 0 : i32
    return %arg0, %c0_i32, %arg1 : i32, i32, i32
  }
  func.func @transform_1(%arg0: i32, %arg1: i32) -> (i32, i32, i32) {
    %c0_i32 = arith.constant 0 : i32
    %c0_i32_0 = arith.constant 0 : i32
    %c0_i32_1 = arith.constant 0 : i32
    return %arg0, %c0_i32, %c0_i32_0 : i32, i32, i32
  }
  func.func @transform_2(%arg0: i32, %arg1: i32) -> (i32, i32) {
    %c0_i32 = arith.constant 0 : i32
    %c0_i32_0 = arith.constant 0 : i32
    %c0_i32_1 = arith.constant 0 : i32
    return %c0_i32, %c0_i32_0 : i32, i32
  }
  func.func @transform_3(%arg0: i32, %arg1: i32) -> (i32, i32) {
    %c0_i32 = arith.constant 0 : i32
    %c0_i32_0 = arith.constant 0 : i32
    %c0_i32_1 = arith.constant 0 : i32
    return %c0_i32, %c0_i32_0 : i32, i32
  }
  func.func @transform_4(%arg0: i32, %arg1: i32) -> (i32, i32) {
    %c0_i32 = arith.constant 0 : i32
    %c0_i32_0 = arith.constant 0 : i32
    %c0_i32_1 = arith.constant 0 : i32
    return %c0_i32, %c0_i32_0 : i32, i32
  }
  func.func @transform_5(%arg0: i32, %arg1: i32) -> (i32, i32) {
    %c0_i32 = arith.constant 0 : i32
    %c0_i32_0 = arith.constant 0 : i32
    %c0_i32_1 = arith.constant 0 : i32
    return %c0_i32, %c0_i32_0 : i32, i32
  }
  func.func @transform_6(%arg0: i32, %arg1: i32) -> (i32, i32) {
    %c0_i32 = arith.constant 0 : i32
    %c0_i32_0 = arith.constant 0 : i32
    %c0_i32_1 = arith.constant 0 : i32
    return %c0_i32, %c0_i32_0 : i32, i32
  }
  func.func @transform_7(%arg0: i32, %arg1: i32) -> (i32, i32) {
    %c0_i32 = arith.constant 0 : i32
    %c0_i32_0 = arith.constant 0 : i32
    %c0_i32_1 = arith.constant 0 : i32
    return %c0_i32, %c0_i32_0 : i32, i32
  }
  func.func @transform_8(%arg0: i32, %arg1: i32) -> (i32, i32) {
    %c0_i32 = arith.constant 0 : i32
    %c0_i32_0 = arith.constant 0 : i32
    %c0_i32_1 = arith.constant 0 : i32
    return %c0_i32, %c0_i32_0 : i32, i32
  }
  func.func @transform_9(%arg0: i32, %arg1: i32) -> (i32, i32, i32) {
    %c0_i32 = arith.constant 0 : i32
    %c0_i32_0 = arith.constant 0 : i32
    return %arg0, %c0_i32, %arg1 : i32, i32, i32
  }
}

</mosaic_0001>

<llo_original>
// kernel: _lambda_.1
$region0: #{_lambda_.1}
  #allocation0 [shape = 'u32[]', space=smem, size = 0x4, offset = 0x4, fixed_abs, tag = 'smem constant byte address 0x4 - core index']
  #allocation1 [shape = 'u32[72,128]{1,0:T(1,128)}', space=vmem, size = 0x9000, scoped, tag = 'internal scratch']
  %s0 = inlined_call_operand.vmem [shape: f32[2,506,64], index: 0, kind: input, shape index: {}]
  %s1 = inlined_call_operand.vmem [shape: f32[2,256,1], index: 1, kind: input, shape index: {}]
  %s2 = inlined_call_operand.vmem [shape: bf16[256,506], index: 2, kind: input, shape index: {}]
  %s3 = inlined_call_operand.vmem [shape: bf16[256,256], index: 3, kind: input, shape index: {}]
  %s4 = inlined_call_operand.vmem [shape: f32[256,1], index: 4, kind: input, shape index: {}]
  %s5 = inlined_call_operand.vmem [shape: bf16[256,256], index: 5, kind: input, shape index: {}]
  %s6 = inlined_call_operand.vmem [shape: f32[256,1], index: 6, kind: input, shape index: {}]
  %s7 = inlined_call_operand.vmem [shape: bf16[256,256], index: 7, kind: input, shape index: {}]
  %s8 = inlined_call_operand.vmem [shape: f32[256,1], index: 8, kind: input, shape index: {}]
  %s9 = inlined_call_operand.vmem [shape: f32[2,256,64], index: 9, kind: output, shape index: {}]
  %s10 = sld [smem:[#allocation0]]
  $region69: #{_lambda_.1} parent=0
    _
  %s12 = ssub.s32 1, %s10
  %s13 = scalar_select 0, %s12, %s10
  loop: start=0, step=1, limit=4
  $region2: #{_lambda_.1} parent=0 // loop_pre_header
    _
  $region3: #{_lambda_.1} parent=0 // loop_header
    %s15 = sphi 0, %s19
    %p16 = scmp.ge.s32.totalorder %s15, 4
    %s22 = sphi 0, %s34
    %s23 = sphi 0, %s30
    %s24 = sphi 0, %s22
    %s25 = sphi 0, %s23
    %s26 = sphi 0, %s24
    %s27 = sphi 0, %s25
    %s39 = sphi 0, %s41
    %s42 = sphi 0, %s39
    %s43 = sphi 0, %s42
    %s59 = sphi 0, %s43
    %s65 = sphi 0, %s67
    %s68 = sphi 0, %s65
    %s69 = sphi 0, %s68
    %s85 = sphi 0, %s69
    %s89 = sphi 0, %s89
    %s91 = sphi 0, %s89
    %s92 = sphi 0, %s91
    %s106 = sphi 0, %s92
    %s110 = sphi 0, %s110
    %s112 = sphi 0, %s110
    %s113 = sphi 0, %s112
    %s127 = sphi 0, %s113
    %s131 = sphi 0, %s131
    %s133 = sphi 0, %s131
    %s134 = sphi 0, %s133
    %s148 = sphi 0, %s134
    %s152 = sphi 0, %s152
    %s154 = sphi 0, %s152
    %s155 = sphi 0, %s154
    %s169 = sphi 0, %s155
    %s173 = sphi 0, %s173
    %s175 = sphi 0, %s173
    %s176 = sphi 0, %s175
    %s190 = sphi 0, %s176
    %s194 = sphi 0, %s194
    %s196 = sphi 0, %s194
    %s197 = sphi 0, %s196
    %s211 = sphi 0, %s197
    %s215 = sphi 0, %s215
    %s217 = sphi 0, %s215
    %s218 = sphi 0, %s217
    %s232 = sphi 0, %s218
    %s240 = sphi 0, %s242
    %s243 = sphi 0, %s240
    %s244 = sphi 0, %s243
    %s260 = sphi 0, %s244
  $region4: #{_lambda_.1} parent=0 // loop_header_branch
    %18 = sbr.rel (%p16) target = $region8
  $region5: #{_lambda_.1} parent=0 // loop_body
    %s20 = ssub.s32 %s15, 1
    %s21 = ssub.s32 %s15, 2
    %s28 = sadd.s32 1, %s23
    %p29 = scmp.ge.s32.totalorder %s28, 1
    %s30 = scalar_select %p29, 0, %s28
    %s31 = sadd.s32 1, %s22
    %s32 = scalar_select %p29, %s31, %s22
    %p33 = scmp.ge.s32.totalorder %s32, 2
    %s34 = scalar_select %p33, 0, %s32
    %s35 = ssub.s32 %s22, %s34
    %s36 = ssub.s32 %s23, %s30
    %s37 = sor.u32 %s35, %s36
    %p38 = scmp.eq.s32.totalorder %s37, 0
    %s40 = sadd.s32 %s39, 1
    %s41 = scalar_select %p38, %s39, %s40
    %p44 = pneg %p38
    %p45 = scmp.eq.s32.totalorder %s15, 1
    %p46 = por %p44, %p45
    %p47 = scmp.ne.s32.totalorder %s39, %s42
    %p48 = scmp.eq.s32.totalorder %s15, 0
    %p49 = por %p47, %p48
    %p50 = scmp.ne.s32.totalorder %s39, %s42
    %p51 = scmp.eq.s32.totalorder %s20, 1
    %p52 = por %p50, %p51
    %p53 = scmp.ne.s32.totalorder %s42, %s43
    %p54 = scmp.eq.s32.totalorder %s20, 0
    %p55 = por %p53, %p54
    %p56 = scmp.ne.s32.totalorder %s42, %s43
    %p57 = scmp.eq.s32.totalorder %s21, 1
    %p58 = por %p56, %p57
    %p60 = scmp.ne.s32.totalorder %s43, %s59
    %p61 = scmp.eq.s32.totalorder %s21, 0
    %p62 = por %p60, %p61
    %s63 = ssub.s32 %s22, %s34
    %p64 = scmp.eq.s32.totalorder %s63, 0
    %s66 = sadd.s32 %s65, 1
    %s67 = scalar_select %p64, %s65, %s66
    %p70 = pneg %p64
    %p71 = scmp.eq.s32.totalorder %s15, 1
    %p72 = por %p70, %p71
    %p73 = scmp.ne.s32.totalorder %s65, %s68
    %p74 = scmp.eq.s32.totalorder %s15, 0
    %p75 = por %p73, %p74
    %p76 = scmp.ne.s32.totalorder %s65, %s68
    %p77 = scmp.eq.s32.totalorder %s20, 1
    %p78 = por %p76, %p77
    %p79 = scmp.ne.s32.totalorder %s68, %s69
    %p80 = scmp.eq.s32.totalorder %s20, 0
    %p81 = por %p79, %p80
    %p82 = scmp.ne.s32.totalorder %s68, %s69
    %p83 = scmp.eq.s32.totalorder %s21, 1
    %p84 = por %p82, %p83
    %p86 = scmp.ne.s32.totalorder %s69, %s85
    %p87 = scmp.eq.s32.totalorder %s21, 0
    %p88 = por %p86, %p87
    %s90 = sadd.s32 %s89, 1
    %p93 = scmp.eq.s32.totalorder %s15, 1
    %p94 = scmp.ne.s32.totalorder %s89, %s91
    %p95 = scmp.eq.s32.totalorder %s15, 0
    %p96 = por %p94, %p95
    %p97 = scmp.ne.s32.totalorder %s89, %s91
    %p98 = scmp.eq.s32.totalorder %s20, 1
    %p99 = por %p97, %p98
    %p100 = scmp.ne.s32.totalorder %s91, %s92
    %p101 = scmp.eq.s32.totalorder %s20, 0
    %p102 = por %p100, %p101
    %p103 = scmp.ne.s32.totalorder %s91, %s92
    %p104 = scmp.eq.s32.totalorder %s21, 1
    %p105 = por %p103, %p104
    %p107 = scmp.ne.s32.totalorder %s92, %s106
    %p108 = scmp.eq.s32.totalorder %s21, 0
    %p109 = por %p107, %p108
    %s111 = sadd.s32 %s110, 1
    %p114 = scmp.eq.s32.totalorder %s15, 1
    %p115 = scmp.ne.s32.totalorder %s110, %s112
    %p116 = scmp.eq.s32.totalorder %s15, 0
    %p117 = por %p115, %p116
    %p118 = scmp.ne.s32.totalorder %s110, %s112
    %p119 = scmp.eq.s32.totalorder %s20, 1
    %p120 = por %p118, %p119
    %p121 = scmp.ne.s32.totalorder %s112, %s113
    %p122 = scmp.eq.s32.totalorder %s20, 0
    %p123 = por %p121, %p122
    %p124 = scmp.ne.s32.totalorder %s112, %s113
    %p125 = scmp.eq.s32.totalorder %s21, 1
    %p126 = por %p124, %p125
    %p128 = scmp.ne.s32.totalorder %s113, %s127
    %p129 = scmp.eq.s32.totalorder %s21, 0
    %p130 = por %p128, %p129
    %s132 = sadd.s32 %s131, 1
    %p135 = scmp.eq.s32.totalorder %s15, 1
    %p136 = scmp.ne.s32.totalorder %s131, %s133
    %p137 = scmp.eq.s32.totalorder %s15, 0
    %p138 = por %p136, %p137
    %p139 = scmp.ne.s32.totalorder %s131, %s133
    %p140 = scmp.eq.s32.totalorder %s20, 1
    %p141 = por %p139, %p140
    %p142 = scmp.ne.s32.totalorder %s133, %s134
    %p143 = scmp.eq.s32.totalorder %s20, 0
    %p144 = por %p142, %p143
    %p145 = scmp.ne.s32.totalorder %s133, %s134
    %p146 = scmp.eq.s32.totalorder %s21, 1
    %p147 = por %p145, %p146
    %p149 = scmp.ne.s32.totalorder %s134, %s148
    %p150 = scmp.eq.s32.totalorder %s21, 0
    %p151 = por %p149, %p150
    %s153 = sadd.s32 %s152, 1
    %p156 = scmp.eq.s32.totalorder %s15, 1
    %p157 = scmp.ne.s32.totalorder %s152, %s154
    %p158 = scmp.eq.s32.totalorder %s15, 0
    %p159 = por %p157, %p158
    %p160 = scmp.ne.s32.totalorder %s152, %s154
    %p161 = scmp.eq.s32.totalorder %s20, 1
    %p162 = por %p160, %p161
    %p163 = scmp.ne.s32.totalorder %s154, %s155
    %p164 = scmp.eq.s32.totalorder %s20, 0
    %p165 = por %p163, %p164
    %p166 = scmp.ne.s32.totalorder %s154, %s155
    %p167 = scmp.eq.s32.totalorder %s21, 1
    %p168 = por %p166, %p167
    %p170 = scmp.ne.s32.totalorder %s155, %s169
    %p171 = scmp.eq.s32.totalorder %s21, 0
    %p172 = por %p170, %p171
    %s174 = sadd.s32 %s173, 1
    %p177 = scmp.eq.s32.totalorder %s15, 1
    %p178 = scmp.ne.s32.totalorder %s173, %s175
    %p179 = scmp.eq.s32.totalorder %s15, 0
    %p180 = por %p178, %p179
    %p181 = scmp.ne.s32.totalorder %s173, %s175
    %p182 = scmp.eq.s32.totalorder %s20, 1
    %p183 = por %p181, %p182
    %p184 = scmp.ne.s32.totalorder %s175, %s176
    %p185 = scmp.eq.s32.totalorder %s20, 0
    %p186 = por %p184, %p185
    %p187 = scmp.ne.s32.totalorder %s175, %s176
    %p188 = scmp.eq.s32.totalorder %s21, 1
    %p189 = por %p187, %p188
    %p191 = scmp.ne.s32.totalorder %s176, %s190
    %p192 = scmp.eq.s32.totalorder %s21, 0
    %p193 = por %p191, %p192
    %s195 = sadd.s32 %s194, 1
    %p198 = scmp.eq.s32.totalorder %s15, 1
    %p199 = scmp.ne.s32.totalorder %s194, %s196
    %p200 = scmp.eq.s32.totalorder %s15, 0
    %p201 = por %p199, %p200
    %p202 = scmp.ne.s32.totalorder %s194, %s196
    %p203 = scmp.eq.s32.totalorder %s20, 1
    %p204 = por %p202, %p203
    %p205 = scmp.ne.s32.totalorder %s196, %s197
    %p206 = scmp.eq.s32.totalorder %s20, 0
    %p207 = por %p205, %p206
    %p208 = scmp.ne.s32.totalorder %s196, %s197
    %p209 = scmp.eq.s32.totalorder %s21, 1
    %p210 = por %p208, %p209
    %p212 = scmp.ne.s32.totalorder %s197, %s211
    %p213 = scmp.eq.s32.totalorder %s21, 0
    %p214 = por %p212, %p213
    %s216 = sadd.s32 %s215, 1
    %p219 = scmp.eq.s32.totalorder %s15, 1
    %p220 = scmp.ne.s32.totalorder %s215, %s217
    %p221 = scmp.eq.s32.totalorder %s15, 0
    %p222 = por %p220, %p221
    %p223 = scmp.ne.s32.totalorder %s215, %s217
    %p224 = scmp.eq.s32.totalorder %s20, 1
    %p225 = por %p223, %p224
    %p226 = scmp.ne.s32.totalorder %s217, %s218
    %p227 = scmp.eq.s32.totalorder %s20, 0
    %p228 = por %p226, %p227
    %p229 = scmp.ne.s32.totalorder %s217, %s218
    %p230 = scmp.eq.s32.totalorder %s21, 1
    %p231 = por %p229, %p230
    %p233 = scmp.ne.s32.totalorder %s218, %s232
    %p234 = scmp.eq.s32.totalorder %s21, 0
    %p235 = por %p233, %p234
    %s236 = ssub.s32 %s22, %s34
    %s237 = ssub.s32 %s23, %s30
    %s238 = sor.u32 %s236, %s237
    %p239 = scmp.eq.s32.totalorder %s238, 0
    %s241 = sadd.s32 %s240, 1
    %s242 = scalar_select %p239, %s240, %s241
    %p245 = pneg %p239
    %p246 = scmp.eq.s32.totalorder %s15, 1
    %p247 = por %p245, %p246
    %p248 = scmp.ne.s32.totalorder %s240, %s243
    %p249 = scmp.eq.s32.totalorder %s15, 0
    %p250 = por %p248, %p249
    %p251 = scmp.ne.s32.totalorder %s240, %s243
    %p252 = scmp.eq.s32.totalorder %s20, 1
    %p253 = por %p251, %p252
    %p254 = scmp.ne.s32.totalorder %s243, %s244
    %p255 = scmp.eq.s32.totalorder %s20, 0
    %p256 = por %p254, %p255
    %p257 = scmp.ne.s32.totalorder %s243, %s244
    %p258 = scmp.eq.s32.totalorder %s21, 1
    %p259 = por %p257, %p258
    %p261 = scmp.ne.s32.totalorder %s244, %s260
    %p262 = scmp.eq.s32.totalorder %s21, 0
    %p263 = por %p261, %p262
    %p264 = scmp.le.s32.totalorder 1, %s15
    %p265 = scmp.lt.s32.totalorder %s15, 3
    %p266 = pnand %p264, %p265
    %p267 = pneg %p266
    // Predicated region
    $region9: #{_lambda_.1} parent=5 // pred_check
      _
    $region10: #{_lambda_.1} parent=5 // pred_check_branch
      %269 = sbr.rel (%p266) target = $region12
    $region11: #{_lambda_.1} parent=5 // pred_region
      %s270 = ssub.s32 %s15, 1
      // Predicated region
      $region13: #{_lambda_.1} parent=11 // pred_check
        %p271 = pneg %p102
      $region14: #{_lambda_.1} parent=11 // pred_check_branch
        %273 = sbr.rel (%p271) target = $region16
      $region15: #{_lambda_.1} parent=11 // pred_region
        _
      $region16: #{_lambda_.1} parent=11 // pred_fallthru
        _
      // Predicated region
      $region17: #{_lambda_.1} parent=11 // pred_check
        %p274 = pneg %p123
      $region18: #{_lambda_.1} parent=11 // pred_check_branch
        %276 = sbr.rel (%p274) target = $region20
      $region19: #{_lambda_.1} parent=11 // pred_region
        _
      $region20: #{_lambda_.1} parent=11 // pred_fallthru
        _
      // Predicated region
      $region21: #{_lambda_.1} parent=11 // pred_check
        %p277 = pneg %p144
      $region22: #{_lambda_.1} parent=11 // pred_check_branch
        %279 = sbr.rel (%p277) target = $region24
      $region23: #{_lambda_.1} parent=11 // pred_region
        _
      $region24: #{_lambda_.1} parent=11 // pred_fallthru
        _
      // Predicated region
      $region25: #{_lambda_.1} parent=11 // pred_check
        %p280 = pneg %p165
      $region26: #{_lambda_.1} parent=11 // pred_check_branch
        %282 = sbr.rel (%p280) target = $region28
      $region27: #{_lambda_.1} parent=11 // pred_region
        _
      $region28: #{_lambda_.1} parent=11 // pred_fallthru
        _
      // Predicated region
      $region29: #{_lambda_.1} parent=11 // pred_check
        %p283 = pneg %p186
      $region30: #{_lambda_.1} parent=11 // pred_check_branch
        %285 = sbr.rel (%p283) target = $region32
      $region31: #{_lambda_.1} parent=11 // pred_region
        _
      $region32: #{_lambda_.1} parent=11 // pred_fallthru
        _
      // Predicated region
      $region33: #{_lambda_.1} parent=11 // pred_check
        %p286 = pneg %p207
      $region34: #{_lambda_.1} parent=11 // pred_check_branch
        %288 = sbr.rel (%p286) target = $region36
      $region35: #{_lambda_.1} parent=11 // pred_region
        _
      $region36: #{_lambda_.1} parent=11 // pred_fallthru
        _
      // Predicated region
      $region37: #{_lambda_.1} parent=11 // pred_check
        %p289 = pneg %p228
      $region38: #{_lambda_.1} parent=11 // pred_check_branch
        %291 = sbr.rel (%p289) target = $region40
      $region39: #{_lambda_.1} parent=11 // pred_region
        _
      $region40: #{_lambda_.1} parent=11 // pred_fallthru
        _
    $region12: #{_lambda_.1} parent=5 // pred_fallthru
      _
    %p292 = scmp.lt.s32.totalorder %s15, 2
    // Predicated region
    $region41: #{_lambda_.1} parent=5 // pred_check
      %p293 = pneg %p292
    $region42: #{_lambda_.1} parent=5 // pred_check_branch
      %295 = sbr.rel (%p293) target = $region44
    $region43: #{_lambda_.1} parent=5 // pred_region
      // Predicated region
      $region45: #{_lambda_.1} parent=43 // pred_check
        %p296 = pneg %p49
      $region46: #{_lambda_.1} parent=43 // pred_check_branch
        %298 = sbr.rel (%p296) target = $region48
      $region47: #{_lambda_.1} parent=43 // pred_region
        %p299 = scmp.lt.s32.totalorder %s22, 1
        %s300 = scalar_select %p299, %s22, 1
        %p301 = scmp.lt.s32.totalorder %s23, 0
        %s302 = scalar_select %p301, %s23, 0
        %s303 = smul.addr %s300, 64
        %s304 = sadd.s32 %s302, %s303
        %s305 = smul.addr %s304, 8
        %s306 = scalar_lea.vmem %s0, %s305
      $region48: #{_lambda_.1} parent=43 // pred_fallthru
        _
      // Predicated region
      $region49: #{_lambda_.1} parent=43 // pred_check
        %p307 = pneg %p75
      $region50: #{_lambda_.1} parent=43 // pred_check_branch
        %309 = sbr.rel (%p307) target = $region52
      $region51: #{_lambda_.1} parent=43 // pred_region
        %p310 = scmp.lt.s32.totalorder %s22, 1
        %s311 = scalar_select %p310, %s22, 1
        %s312 = smul.addr %s311, 32
        %s313 = smul.addr %s312, 8
        %s314 = scalar_lea.vmem %s1, %s313
      $region52: #{_lambda_.1} parent=43 // pred_fallthru
        _
    $region44: #{_lambda_.1} parent=5 // pred_fallthru
      _
    %p315 = scmp.le.s32.totalorder 1, %s15
    %p316 = scmp.lt.s32.totalorder %s15, 3
    %p317 = pnand %p315, %p316
    %p318 = pneg %p317
    // Predicated region
    $region53: #{_lambda_.1} parent=5 // pred_check
      _
    $region54: #{_lambda_.1} parent=5 // pred_check_branch
      %320 = sbr.rel (%p317) target = $region56
    $region55: #{_lambda_.1} parent=5 // pred_region
      %s321 = ssub.s32 %s15, 1
      %p322 = scmp.lt.s32.totalorder %s24, 1
      %s323 = scalar_select %p322, %s24, 1
      %p324 = scmp.lt.s32.totalorder %s25, 0
      %s325 = scalar_select %p324, %s25, 0
      %s326 = smul.addr %s323, 64
      %s327 = sadd.s32 %s325, %s326
      %s328 = smul.addr %s327, 8
      %s329 = scalar_lea.vmem %s0, %s328
      %p330 = pneg %p55
      %p331 = pneg %p52
      %p332 = scmp.lt.s32.totalorder %s24, 1
      %s333 = scalar_select %p332, %s24, 1
      %s334 = smul.addr %s333, 32
      %s335 = smul.addr %s334, 8
      %s336 = scalar_lea.vmem %s1, %s335
      %p337 = pneg %p81
      %p338 = pneg %p78
      %p339 = pneg %p102
      %p340 = pneg %p99
      %p341 = pneg %p123
      %p342 = pneg %p120
      %p343 = pneg %p144
      %p344 = pneg %p141
      %p345 = pneg %p165
      %p346 = pneg %p162
      %p347 = pneg %p186
      %p348 = pneg %p183
      %p349 = pneg %p207
      %p350 = pneg %p204
      %p351 = pneg %p228
      %p352 = pneg %p225
      %p353 = pneg %p256
      %p354 = pneg %p253
      %p355 = scmp.lt.s32.totalorder %s24, 1
      %s356 = scalar_select %p355, %s24, 1
      %p357 = scmp.lt.s32.totalorder %s25, 0
      %s358 = scalar_select %p357, %s25, 0
      %s359 = smul.addr %s356, 32
      %s360 = sadd.s32 %s358, %s359
      %s361 = smul.addr %s360, 8
      %s362 = scalar_lea.vmem %s9, %s361
      %p363 = scmp.lt.s32.totalorder %s24, 1
      %s364 = scalar_select %p363, %s24, 1
      %p365 = scmp.lt.s32.totalorder %s25, 0
      %s366 = scalar_select %p365, %s25, 0
      %s367 = smul.addr %s364, 64
      %s368 = sadd.s32 %s366, %s367
      %s369 = smul.addr %s368, 8
      %s370 = scalar_lea.vmem %s0, %s369
      %p371 = scmp.lt.s32.totalorder %s24, 1
      %s372 = scalar_select %p371, %s24, 1
      %s373 = smul.addr %s372, 32
      %s374 = smul.addr %s373, 8
      %s375 = scalar_lea.vmem %s1, %s374
      %p376 = scmp.lt.s32.totalorder %s24, 1
      %s377 = scalar_select %p376, %s24, 1
      %p378 = scmp.lt.s32.totalorder %s25, 0
      %s379 = scalar_select %p378, %s25, 0
      %s380 = smul.addr %s377, 32
      %s381 = sadd.s32 %s379, %s380
      %s382 = smul.addr %s381, 8
      %s383 = scalar_lea.vmem %s9, %s382
      %v384 = vld [vmem:[%s370] sm:$0xff]
      %v385 = vld [vmem:[%s370 + $0x8] sm:$0xff]
      %v386 = vld [vmem:[%s370 + $0x10] sm:$0xff]
      %v387 = vld [vmem:[%s370 + $0x18] sm:$0xff]
      %v388 = vld [vmem:[%s370 + $0x20] sm:$0xff]
      %v389 = vld [vmem:[%s370 + $0x28] sm:$0xff]
      %v390 = vld [vmem:[%s370 + $0x30] sm:$0xff]
      %v391 = vld [vmem:[%s370 + $0x38] sm:$0xff]
      %v392 = vld [vmem:[%s370 + $0x40] sm:$0xff]
      %v393 = vld [vmem:[%s370 + $0x48] sm:$0xff]
      %v394 = vld [vmem:[%s370 + $0x50] sm:$0xff]
      %v395 = vld [vmem:[%s370 + $0x58] sm:$0xff]
      %v396 = vld [vmem:[%s370 + $0x60] sm:$0xff]
      %v397 = vld [vmem:[%s370 + $0x68] sm:$0xff]
      %v398 = vld [vmem:[%s370 + $0x70] sm:$0xff]
      %v399 = vld [vmem:[%s370 + $0x78] sm:$0xff]
      %v400 = vld [vmem:[%s370 + $0x80] sm:$0xff]
      %v401 = vld [vmem:[%s370 + $0x88] sm:$0xff]
      %v402 = vld [vmem:[%s370 + $0x90] sm:$0xff]
      %v403 = vld [vmem:[%s370 + $0x98] sm:$0xff]
      %v404 = vld [vmem:[%s370 + $0xa0] sm:$0xff]
      %v405 = vld [vmem:[%s370 + $0xa8] sm:$0xff]
      %v406 = vld [vmem:[%s370 + $0xb0] sm:$0xff]
      %v407 = vld [vmem:[%s370 + $0xb8] sm:$0xff]
      %v408 = vld [vmem:[%s370 + $0xc0] sm:$0xff]
      %v409 = vld [vmem:[%s370 + $0xc8] sm:$0xff]
      %v410 = vld [vmem:[%s370 + $0xd0] sm:$0xff]
      %v411 = vld [vmem:[%s370 + $0xd8] sm:$0xff]
      %v412 = vld [vmem:[%s370 + $0xe0] sm:$0xff]
      %v413 = vld [vmem:[%s370 + $0xe8] sm:$0xff]
      %v414 = vld [vmem:[%s370 + $0xf0] sm:$0xff]
      %v415 = vld [vmem:[%s370 + $0xf8] sm:$0xff]
      %v416 = vld [vmem:[%s370 + $0x100] sm:$0xff]
      %v417 = vld [vmem:[%s370 + $0x108] sm:$0xff]
      %v418 = vld [vmem:[%s370 + $0x110] sm:$0xff]
      %v419 = vld [vmem:[%s370 + $0x118] sm:$0xff]
      %v420 = vld [vmem:[%s370 + $0x120] sm:$0xff]
      %v421 = vld [vmem:[%s370 + $0x128] sm:$0xff]
      %v422 = vld [vmem:[%s370 + $0x130] sm:$0xff]
      %v423 = vld [vmem:[%s370 + $0x138] sm:$0xff]
      %v424 = vld [vmem:[%s370 + $0x140] sm:$0xff]
      %v425 = vld [vmem:[%s370 + $0x148] sm:$0xff]
      %v426 = vld [vmem:[%s370 + $0x150] sm:$0xff]
      %v427 = vld [vmem:[%s370 + $0x158] sm:$0xff]
      %v428 = vld [vmem:[%s370 + $0x160] sm:$0xff]
      %v429 = vld [vmem:[%s370 + $0x168] sm:$0xff]
      %v430 = vld [vmem:[%s370 + $0x170] sm:$0xff]
      %v431 = vld [vmem:[%s370 + $0x178] sm:$0xff]
      %v432 = vld [vmem:[%s370 + $0x180] sm:$0xff]
      %v433 = vld [vmem:[%s370 + $0x188] sm:$0xff]
      %v434 = vld [vmem:[%s370 + $0x190] sm:$0xff]
      %v435 = vld [vmem:[%s370 + $0x198] sm:$0xff]
      %v436 = vld [vmem:[%s370 + $0x1a0] sm:$0xff]
      %v437 = vld [vmem:[%s370 + $0x1a8] sm:$0xff]
      %v438 = vld [vmem:[%s370 + $0x1b0] sm:$0xff]
      %v439 = vld [vmem:[%s370 + $0x1b8] sm:$0xff]
      %v440 = vld [vmem:[%s370 + $0x1c0] sm:$0xff]
      %v441 = vld [vmem:[%s370 + $0x1c8] sm:$0xff]
      %v442 = vld [vmem:[%s370 + $0x1d0] sm:$0xff]
      %v443 = vld [vmem:[%s370 + $0x1d8] sm:$0xff]
      %v444 = vld [vmem:[%s370 + $0x1e0] sm:$0xff]
      %v445 = vld [vmem:[%s370 + $0x1e8] sm:$0xff]
      %v446 = vld [vmem:[%s370 + $0x1f0] sm:$0xff]
      %v447 = vld [vmem:[%s370 + $0x1f8] sm:$0x3]
      %v448 = vpack.c.bf16 %v385, %v384
      %v449 = vpack.c.bf16 %v387, %v386
      %v450 = vpack.c.bf16 %v389, %v388
      %v451 = vpack.c.bf16 %v391, %v390
      %v452 = vpack.c.bf16 %v393, %v392
      %v453 = vpack.c.bf16 %v395, %v394
      %v454 = vpack.c.bf16 %v397, %v396
      %v455 = vpack.c.bf16 %v399, %v398
      %v456 = vpack.c.bf16 %v401, %v400
      %v457 = vpack.c.bf16 %v403, %v402
      %v458 = vpack.c.bf16 %v405, %v404
      %v459 = vpack.c.bf16 %v407, %v406
      %v460 = vpack.c.bf16 %v409, %v408
      %v461 = vpack.c.bf16 %v411, %v410
      %v462 = vpack.c.bf16 %v413, %v412
      %v463 = vpack.c.bf16 %v415, %v414
      %v464 = vpack.c.bf16 %v417, %v416
      %v465 = vpack.c.bf16 %v419, %v418
      %v466 = vpack.c.bf16 %v421, %v420
      %v467 = vpack.c.bf16 %v423, %v422
      %v468 = vpack.c.bf16 %v425, %v424
      %v469 = vpack.c.bf16 %v427, %v426
      %v470 = vpack.c.bf16 %v429, %v428
      %v471 = vpack.c.bf16 %v431, %v430
      %v472 = vpack.c.bf16 %v433, %v432
      %v473 = vpack.c.bf16 %v435, %v434
      %v474 = vpack.c.bf16 %v437, %v436
      %v475 = vpack.c.bf16 %v439, %v438
      %v476 = vpack.c.bf16 %v441, %v440
      %v477 = vpack.c.bf16 %v443, %v442
      %v478 = vpack.c.bf16 %v445, %v444
      %v479 = vpack.c.bf16 %v447, %v446
      %v480 = vld [vmem:[%s2] sm:$0xff]
      %v481 = vld [vmem:[%s2 + $0x8] sm:$0xff]
      %v482 = vld [vmem:[%s2 + $0x10] sm:$0xff]
      %v483 = vld [vmem:[%s2 + $0x18] sm:$0xff]
      %v484 = vld [vmem:[%s2 + $0x20] sm:$0xff]
      %v485 = vld [vmem:[%s2 + $0x28] sm:$0xff]
      %v486 = vld [vmem:[%s2 + $0x30] sm:$0xff]
      %v487 = vld [vmem:[%s2 + $0x38] sm:$0xff]
      %v488 = vld [vmem:[%s2 + $0x40] sm:$0xff]
      %v489 = vld [vmem:[%s2 + $0x48] sm:$0xff]
      %v490 = vld [vmem:[%s2 + $0x50] sm:$0xff]
      %v491 = vld [vmem:[%s2 + $0x58] sm:$0xff]
      %v492 = vld [vmem:[%s2 + $0x60] sm:$0xff]
      %v493 = vld [vmem:[%s2 + $0x68] sm:$0xff]
      %v494 = vld [vmem:[%s2 + $0x70] sm:$0xff]
      %v495 = vld [vmem:[%s2 + $0x78] sm:$0xff]
      %v496 = vld [vmem:[%s2 + $0x80] sm:$0xff]
      %v497 = vld [vmem:[%s2 + $0x88] sm:$0xff]
      %v498 = vld [vmem:[%s2 + $0x90] sm:$0xff]
      %v499 = vld [vmem:[%s2 + $0x98] sm:$0xff]
      %v500 = vld [vmem:[%s2 + $0xa0] sm:$0xff]
      %v501 = vld [vmem:[%s2 + $0xa8] sm:$0xff]
      %v502 = vld [vmem:[%s2 + $0xb0] sm:$0xff]
      %v503 = vld [vmem:[%s2 + $0xb8] sm:$0xff]
      %v504 = vld [vmem:[%s2 + $0xc0] sm:$0xff]
      %v505 = vld [vmem:[%s2 + $0xc8] sm:$0xff]
      %v506 = vld [vmem:[%s2 + $0xd0] sm:$0xff]
      %v507 = vld [vmem:[%s2 + $0xd8] sm:$0xff]
      %v508 = vld [vmem:[%s2 + $0xe0] sm:$0xff]
      %v509 = vld [vmem:[%s2 + $0xe8] sm:$0xff]
      %v510 = vld [vmem:[%s2 + $0xf0] sm:$0xff]
      %v511 = vld [vmem:[%s2 + $0xf8] sm:$0xff]
      %v512 = vld [vmem:[%s2 + $0x100] sm:$0xff]
      %v513 = vld [vmem:[%s2 + $0x108] sm:$0xff]
      %v514 = vld [vmem:[%s2 + $0x110] sm:$0xff]
      %v515 = vld [vmem:[%s2 + $0x118] sm:$0xff]
      %v516 = vld [vmem:[%s2 + $0x120] sm:$0xff]
      %v517 = vld [vmem:[%s2 + $0x128] sm:$0xff]
      %v518 = vld [vmem:[%s2 + $0x130] sm:$0xff]
      %v519 = vld [vmem:[%s2 + $0x138] sm:$0xff]
      %v520 = vld [vmem:[%s2 + $0x140] sm:$0xff]
      %v521 = vld [vmem:[%s2 + $0x148] sm:$0xff]
      %v522 = vld [vmem:[%s2 + $0x150] sm:$0xff]
      %v523 = vld [vmem:[%s2 + $0x158] sm:$0xff]
      %v524 = vld [vmem:[%s2 + $0x160] sm:$0xff]
      %v525 = vld [vmem:[%s2 + $0x168] sm:$0xff]
      %v526 = vld [vmem:[%s2 + $0x170] sm:$0xff]
      %v527 = vld [vmem:[%s2 + $0x178] sm:$0xff]
      %v528 = vld [vmem:[%s2 + $0x180] sm:$0xff]
      %v529 = vld [vmem:[%s2 + $0x188] sm:$0xff]
      %v530 = vld [vmem:[%s2 + $0x190] sm:$0xff]
      %v531 = vld [vmem:[%s2 + $0x198] sm:$0xff]
      %v532 = vld [vmem:[%s2 + $0x1a0] sm:$0xff]
      %v533 = vld [vmem:[%s2 + $0x1a8] sm:$0xff]
      %v534 = vld [vmem:[%s2 + $0x1b0] sm:$0xff]
      %v535 = vld [vmem:[%s2 + $0x1b8] sm:$0xff]
      %v536 = vld [vmem:[%s2 + $0x1c0] sm:$0xff]
      %v537 = vld [vmem:[%s2 + $0x1c8] sm:$0xff]
      %v538 = vld [vmem:[%s2 + $0x1d0] sm:$0xff]
      %v539 = vld [vmem:[%s2 + $0x1d8] sm:$0xff]
      %v540 = vld [vmem:[%s2 + $0x1e0] sm:$0xff]
      %v541 = vld [vmem:[%s2 + $0x1e8] sm:$0xff]
      %v542 = vld [vmem:[%s2 + $0x1f0] sm:$0xff]
      %v543 = vld [vmem:[%s2 + $0x1f8] sm:$0xff]
      %v544 = vld [vmem:[%s375] sm:$0xff]
      %v545 = vld [vmem:[%s375 + $0x8] sm:$0xff]
      %v546 = vld [vmem:[%s375 + $0x10] sm:$0xff]
      %v547 = vld [vmem:[%s375 + $0x18] sm:$0xff]
      %v548 = vld [vmem:[%s375 + $0x20] sm:$0xff]
      %v549 = vld [vmem:[%s375 + $0x28] sm:$0xff]
      %v550 = vld [vmem:[%s375 + $0x30] sm:$0xff]
      %v551 = vld [vmem:[%s375 + $0x38] sm:$0xff]
      %v552 = vld [vmem:[%s375 + $0x40] sm:$0xff]
      %v553 = vld [vmem:[%s375 + $0x48] sm:$0xff]
      %v554 = vld [vmem:[%s375 + $0x50] sm:$0xff]
      %v555 = vld [vmem:[%s375 + $0x58] sm:$0xff]
      %v556 = vld [vmem:[%s375 + $0x60] sm:$0xff]
      %v557 = vld [vmem:[%s375 + $0x68] sm:$0xff]
      %v558 = vld [vmem:[%s375 + $0x70] sm:$0xff]
      %v559 = vld [vmem:[%s375 + $0x78] sm:$0xff]
      %v560 = vld [vmem:[%s375 + $0x80] sm:$0xff]
      %v561 = vld [vmem:[%s375 + $0x88] sm:$0xff]
      %v562 = vld [vmem:[%s375 + $0x90] sm:$0xff]
      %v563 = vld [vmem:[%s375 + $0x98] sm:$0xff]
      %v564 = vld [vmem:[%s375 + $0xa0] sm:$0xff]
      %v565 = vld [vmem:[%s375 + $0xa8] sm:$0xff]
      %v566 = vld [vmem:[%s375 + $0xb0] sm:$0xff]
      %v567 = vld [vmem:[%s375 + $0xb8] sm:$0xff]
      %v568 = vld [vmem:[%s375 + $0xc0] sm:$0xff]
      %v569 = vld [vmem:[%s375 + $0xc8] sm:$0xff]
      %v570 = vld [vmem:[%s375 + $0xd0] sm:$0xff]
      %v571 = vld [vmem:[%s375 + $0xd8] sm:$0xff]
      %v572 = vld [vmem:[%s375 + $0xe0] sm:$0xff]
      %v573 = vld [vmem:[%s375 + $0xe8] sm:$0xff]
      %v574 = vld [vmem:[%s375 + $0xf0] sm:$0xff]
      %v575 = vld [vmem:[%s375 + $0xf8] sm:$0xff]
      %577 = vset.pattern.permute.xlu0 0
      %578 = vperm.xlu0 %577, %v544
      %v579 = vpop.permute.xlu0 %578
      %582 = vset.pattern.permute.xlu0 0
      %583 = vperm.xlu0 %582, %v545
      %v584 = vpop.permute.xlu0 %583
      %587 = vset.pattern.permute.xlu0 0
      %588 = vperm.xlu0 %587, %v546
      %v589 = vpop.permute.xlu0 %588
      %592 = vset.pattern.permute.xlu0 0
      %593 = vperm.xlu0 %592, %v547
      %v594 = vpop.permute.xlu0 %593
      %597 = vset.pattern.permute.xlu0 0
      %598 = vperm.xlu0 %597, %v548
      %v599 = vpop.permute.xlu0 %598
      %602 = vset.pattern.permute.xlu0 0
      %603 = vperm.xlu0 %602, %v549
      %v604 = vpop.permute.xlu0 %603
      %607 = vset.pattern.permute.xlu0 0
      %608 = vperm.xlu0 %607, %v550
      %v609 = vpop.permute.xlu0 %608
      %612 = vset.pattern.permute.xlu0 0
      %613 = vperm.xlu0 %612, %v551
      %v614 = vpop.permute.xlu0 %613
      %617 = vset.pattern.permute.xlu0 0
      %618 = vperm.xlu0 %617, %v552
      %v619 = vpop.permute.xlu0 %618
      %622 = vset.pattern.permute.xlu0 0
      %623 = vperm.xlu0 %622, %v553
      %v624 = vpop.permute.xlu0 %623
      %627 = vset.pattern.permute.xlu0 0
      %628 = vperm.xlu0 %627, %v554
      %v629 = vpop.permute.xlu0 %628
      %632 = vset.pattern.permute.xlu0 0
      %633 = vperm.xlu0 %632, %v555
      %v634 = vpop.permute.xlu0 %633
      %637 = vset.pattern.permute.xlu0 0
      %638 = vperm.xlu0 %637, %v556
      %v639 = vpop.permute.xlu0 %638
      %642 = vset.pattern.permute.xlu0 0
      %643 = vperm.xlu0 %642, %v557
      %v644 = vpop.permute.xlu0 %643
      %647 = vset.pattern.permute.xlu0 0
      %648 = vperm.xlu0 %647, %v558
      %v649 = vpop.permute.xlu0 %648
      %652 = vset.pattern.permute.xlu0 0
      %653 = vperm.xlu0 %652, %v559
      %v654 = vpop.permute.xlu0 %653
      %657 = vset.pattern.permute.xlu0 0
      %658 = vperm.xlu0 %657, %v560
      %v659 = vpop.permute.xlu0 %658
      %662 = vset.pattern.permute.xlu0 0
      %663 = vperm.xlu0 %662, %v561
      %v664 = vpop.permute.xlu0 %663
      %667 = vset.pattern.permute.xlu0 0
      %668 = vperm.xlu0 %667, %v562
      %v669 = vpop.permute.xlu0 %668
      %672 = vset.pattern.permute.xlu0 0
      %673 = vperm.xlu0 %672, %v563
      %v674 = vpop.permute.xlu0 %673
      %677 = vset.pattern.permute.xlu0 0
      %678 = vperm.xlu0 %677, %v564
      %v679 = vpop.permute.xlu0 %678
      %682 = vset.pattern.permute.xlu0 0
      %683 = vperm.xlu0 %682, %v565
      %v684 = vpop.permute.xlu0 %683
      %687 = vset.pattern.permute.xlu0 0
      %688 = vperm.xlu0 %687, %v566
      %v689 = vpop.permute.xlu0 %688
      %692 = vset.pattern.permute.xlu0 0
      %693 = vperm.xlu0 %692, %v567
      %v694 = vpop.permute.xlu0 %693
      %697 = vset.pattern.permute.xlu0 0
      %698 = vperm.xlu0 %697, %v568
      %v699 = vpop.permute.xlu0 %698
      %702 = vset.pattern.permute.xlu0 0
      %703 = vperm.xlu0 %702, %v569
      %v704 = vpop.permute.xlu0 %703
      %707 = vset.pattern.permute.xlu0 0
      %708 = vperm.xlu0 %707, %v570
      %v709 = vpop.permute.xlu0 %708
      %712 = vset.pattern.permute.xlu0 0
      %713 = vperm.xlu0 %712, %v571
      %v714 = vpop.permute.xlu0 %713
      %717 = vset.pattern.permute.xlu0 0
      %718 = vperm.xlu0 %717, %v572
      %v719 = vpop.permute.xlu0 %718
      %722 = vset.pattern.permute.xlu0 0
      %723 = vperm.xlu0 %722, %v573
      %v724 = vpop.permute.xlu0 %723
      %727 = vset.pattern.permute.xlu0 0
      %728 = vperm.xlu0 %727, %v574
      %v729 = vpop.permute.xlu0 %728
      %732 = vset.pattern.permute.xlu0 0
      %733 = vperm.xlu0 %732, %v575
      %v734 = vpop.permute.xlu0 %733
      %v800 = vunpack.c.l.b16 %v480
      %v801 = vunpack.c.h.b16 %v480
      %v802 = vunpack.c.l.b16 %v481
      %v803 = vunpack.c.h.b16 %v481
      %v804 = vunpack.c.l.b16 %v482
      %v805 = vunpack.c.h.b16 %v482
      %v806 = vunpack.c.l.b16 %v483
      %v807 = vunpack.c.h.b16 %v483
      %v808 = vunpack.c.l.b16 %v484
      %v809 = vunpack.c.h.b16 %v484
      %v810 = vunpack.c.l.b16 %v485
      %v811 = vunpack.c.h.b16 %v485
      %v812 = vunpack.c.l.b16 %v486
      %v813 = vunpack.c.h.b16 %v486
      %v814 = vunpack.c.l.b16 %v487
      %v815 = vunpack.c.h.b16 %v487
      %v816 = vunpack.c.l.b16 %v488
      %v817 = vunpack.c.h.b16 %v488
      %v818 = vunpack.c.l.b16 %v489
      %v819 = vunpack.c.h.b16 %v489
      %v820 = vunpack.c.l.b16 %v490
      %v821 = vunpack.c.h.b16 %v490
      %v822 = vunpack.c.l.b16 %v491
      %v823 = vunpack.c.h.b16 %v491
      %v824 = vunpack.c.l.b16 %v492
      %v825 = vunpack.c.h.b16 %v492
      %v826 = vunpack.c.l.b16 %v493
      %v827 = vunpack.c.h.b16 %v493
      %v828 = vunpack.c.l.b16 %v494
      %v829 = vunpack.c.h.b16 %v494
      %v830 = vunpack.c.l.b16 %v495
      %v831 = vunpack.c.h.b16 %v495
      %v832 = vunpack.c.l.b16 %v496
      %v833 = vunpack.c.h.b16 %v496
      %v834 = vunpack.c.l.b16 %v497
      %v835 = vunpack.c.h.b16 %v497
      %v836 = vunpack.c.l.b16 %v498
      %v837 = vunpack.c.h.b16 %v498
      %v838 = vunpack.c.l.b16 %v499
      %v839 = vunpack.c.h.b16 %v499
      %v840 = vunpack.c.l.b16 %v500
      %v841 = vunpack.c.h.b16 %v500
      %v842 = vunpack.c.l.b16 %v501
      %v843 = vunpack.c.h.b16 %v501
      %v844 = vunpack.c.l.b16 %v502
      %v845 = vunpack.c.h.b16 %v502
      %v846 = vunpack.c.l.b16 %v503
      %v847 = vunpack.c.h.b16 %v503
      %v848 = vunpack.c.l.b16 %v504
      %v849 = vunpack.c.h.b16 %v504
      %v850 = vunpack.c.l.b16 %v505
      %v851 = vunpack.c.h.b16 %v505
      %v852 = vunpack.c.l.b16 %v506
      %v853 = vunpack.c.h.b16 %v506
      %v854 = vunpack.c.l.b16 %v507
      %v855 = vunpack.c.h.b16 %v507
      %v856 = vunpack.c.l.b16 %v508
      %v857 = vunpack.c.h.b16 %v508
      %v858 = vunpack.c.l.b16 %v509
      %v859 = vunpack.c.h.b16 %v509
      %v860 = vunpack.c.l.b16 %v510
      %v861 = vunpack.c.h.b16 %v510
      %v862 = vunpack.c.l.b16 %v511
      %v863 = vunpack.c.h.b16 %v511
      %v864 = vunpack.c.l.b16 %v512
      %v865 = vunpack.c.h.b16 %v512
      %v866 = vunpack.c.l.b16 %v513
      %v867 = vunpack.c.h.b16 %v513
      %v868 = vunpack.c.l.b16 %v514
      %v869 = vunpack.c.h.b16 %v514
      %v870 = vunpack.c.l.b16 %v515
      %v871 = vunpack.c.h.b16 %v515
      %v872 = vunpack.c.l.b16 %v516
      %v873 = vunpack.c.h.b16 %v516
      %v874 = vunpack.c.l.b16 %v517
      %v875 = vunpack.c.h.b16 %v517
      %v876 = vunpack.c.l.b16 %v518
      %v877 = vunpack.c.h.b16 %v518
      %v878 = vunpack.c.l.b16 %v519
      %v879 = vunpack.c.h.b16 %v519
      %v880 = vunpack.c.l.b16 %v520
      %v881 = vunpack.c.h.b16 %v520
      %v882 = vunpack.c.l.b16 %v521
      %v883 = vunpack.c.h.b16 %v521
      %v884 = vunpack.c.l.b16 %v522
      %v885 = vunpack.c.h.b16 %v522
      %v886 = vunpack.c.l.b16 %v523
      %v887 = vunpack.c.h.b16 %v523
      %v888 = vunpack.c.l.b16 %v524
      %v889 = vunpack.c.h.b16 %v524
      %v890 = vunpack.c.l.b16 %v525
      %v891 = vunpack.c.h.b16 %v525
      %v892 = vunpack.c.l.b16 %v526
      %v893 = vunpack.c.h.b16 %v526
      %v894 = vunpack.c.l.b16 %v527
      %v895 = vunpack.c.h.b16 %v527
      %v896 = vunpack.c.l.b16 %v528
      %v897 = vunpack.c.h.b16 %v528
      %v898 = vunpack.c.l.b16 %v529
      %v899 = vunpack.c.h.b16 %v529
      %v900 = vunpack.c.l.b16 %v530
      %v901 = vunpack.c.h.b16 %v530
      %v902 = vunpack.c.l.b16 %v531
      %v903 = vunpack.c.h.b16 %v531
      %v904 = vunpack.c.l.b16 %v532
      %v905 = vunpack.c.h.b16 %v532
      %v906 = vunpack.c.l.b16 %v533
      %v907 = vunpack.c.h.b16 %v533
      %v908 = vunpack.c.l.b16 %v534
      %v909 = vunpack.c.h.b16 %v534
      %v910 = vunpack.c.l.b16 %v535
      %v911 = vunpack.c.h.b16 %v535
      %v912 = vunpack.c.l.b16 %v536
      %v913 = vunpack.c.h.b16 %v536
      %v914 = vunpack.c.l.b16 %v537
      %v915 = vunpack.c.h.b16 %v537
      %v916 = vunpack.c.l.b16 %v538
      %v917 = vunpack.c.h.b16 %v538
      %v918 = vunpack.c.l.b16 %v539
      %v919 = vunpack.c.h.b16 %v539
      %v920 = vunpack.c.l.b16 %v540
      %v921 = vunpack.c.h.b16 %v540
      %v922 = vunpack.c.l.b16 %v541
      %v923 = vunpack.c.h.b16 %v541
      %v924 = vunpack.c.l.b16 %v542
      %v925 = vunpack.c.h.b16 %v542
      %v926 = vunpack.c.l.b16 %v543
      %v927 = vunpack.c.h.b16 %v543
      %v928 = vpack.c.b16 %v804, %v800
      %v929 = vpack.c.b16 %v805, %v801
      %v930 = vpack.c.b16 %v806, %v802
      %v931 = vpack.c.b16 %v807, %v803
      %v932 = vpack.c.b16 %v812, %v808
      %v933 = vpack.c.b16 %v813, %v809
      %v934 = vpack.c.b16 %v814, %v810
      %v935 = vpack.c.b16 %v815, %v811
      %v936 = vpack.c.b16 %v820, %v816
      %v937 = vpack.c.b16 %v821, %v817
      %v938 = vpack.c.b16 %v822, %v818
      %v939 = vpack.c.b16 %v823, %v819
      %v940 = vpack.c.b16 %v828, %v824
      %v941 = vpack.c.b16 %v829, %v825
      %v942 = vpack.c.b16 %v830, %v826
      %v943 = vpack.c.b16 %v831, %v827
      %v944 = vpack.c.b16 %v836, %v832
      %v945 = vpack.c.b16 %v837, %v833
      %v946 = vpack.c.b16 %v838, %v834
      %v947 = vpack.c.b16 %v839, %v835
      %v948 = vpack.c.b16 %v844, %v840
      %v949 = vpack.c.b16 %v845, %v841
      %v950 = vpack.c.b16 %v846, %v842
      %v951 = vpack.c.b16 %v847, %v843
      %v952 = vpack.c.b16 %v852, %v848
      %v953 = vpack.c.b16 %v853, %v849
      %v954 = vpack.c.b16 %v854, %v850
      %v955 = vpack.c.b16 %v855, %v851
      %v956 = vpack.c.b16 %v860, %v856
      %v957 = vpack.c.b16 %v861, %v857
      %v958 = vpack.c.b16 %v862, %v858
      %v959 = vpack.c.b16 %v863, %v859
      %v960 = vpack.c.b16 %v868, %v864
      %v961 = vpack.c.b16 %v869, %v865
      %v962 = vpack.c.b16 %v870, %v866
      %v963 = vpack.c.b16 %v871, %v867
      %v964 = vpack.c.b16 %v876, %v872
      %v965 = vpack.c.b16 %v877, %v873
      %v966 = vpack.c.b16 %v878, %v874
      %v967 = vpack.c.b16 %v879, %v875
      %v968 = vpack.c.b16 %v884, %v880
      %v969 = vpack.c.b16 %v885, %v881
      %v970 = vpack.c.b16 %v886, %v882
      %v971 = vpack.c.b16 %v887, %v883
      %v972 = vpack.c.b16 %v892, %v888
      %v973 = vpack.c.b16 %v893, %v889
      %v974 = vpack.c.b16 %v894, %v890
      %v975 = vpack.c.b16 %v895, %v891
      %v976 = vpack.c.b16 %v900, %v896
      %v977 = vpack.c.b16 %v901, %v897
      %v978 = vpack.c.b16 %v902, %v898
      %v979 = vpack.c.b16 %v903, %v899
      %v980 = vpack.c.b16 %v908, %v904
      %v981 = vpack.c.b16 %v909, %v905
      %v982 = vpack.c.b16 %v910, %v906
      %v983 = vpack.c.b16 %v911, %v907
      %v984 = vpack.c.b16 %v916, %v912
      %v985 = vpack.c.b16 %v917, %v913
      %v986 = vpack.c.b16 %v918, %v914
      %v987 = vpack.c.b16 %v919, %v915
      %v988 = vpack.c.b16 %v924, %v920
      %v989 = vpack.c.b16 %v925, %v921
      %v990 = vpack.c.b16 %v926, %v922
      %v991 = vpack.c.b16 %v927, %v923
      %vm1040 = vcmask 998400
      %v1042 = vsel %vm1040, %v931, 0
      %v1045 = vsel %vm1040, %v935, 0
      %v1048 = vsel %vm1040, %v939, 0
      %v1051 = vsel %vm1040, %v943, 0
      %v1054 = vsel %vm1040, %v947, 0
      %v1057 = vsel %vm1040, %v951, 0
      %v1060 = vsel %vm1040, %v955, 0
      %v1063 = vsel %vm1040, %v959, 0
      %v1066 = vsel %vm1040, %v963, 0
      %v1069 = vsel %vm1040, %v967, 0
      %v1072 = vsel %vm1040, %v971, 0
      %v1075 = vsel %vm1040, %v975, 0
      %v1078 = vsel %vm1040, %v979, 0
      %v1081 = vsel %vm1040, %v983, 0
      %v1084 = vsel %vm1040, %v987, 0
      %v1087 = vsel %vm1040, %v991, 0
      %vm1089 = vcmask 1044480
      %v1091 = vsel %vm1089, %v479, 0
      %1093 = vmatpush.bf16.msra.mxu0 %v455
      %1094 = vmatpush.bf16.msra.mxu0 %v454
      %1095 = vmatpush.bf16.msra.mxu0 %v453
      %1096 = vmatpush.bf16.msra.mxu0 %v452
      %1097 = vmatpush.bf16.msra.mxu0 %v451
      %1098 = vmatpush.bf16.msra.mxu0 %v450
      %1099 = vmatpush.bf16.msra.mxu0 %v449
      %1100 = vmatpush.bf16.msra.mxu0 %v448
      %1101 = vmatmul.bf16.gmra.mxu0 %v928
      %v1102 = vpop.f32.mrf.mxu0
      %v1103 = vadd.f32 %v579, %v1102
      %v1104 = vpop.f32.mrf.mxu0
      %v1105 = vadd.f32 %v584, %v1104
      %1106 = vmatmul.bf16.gmra.mxu0 %v932
      %v1107 = vpop.f32.mrf.mxu0
      %v1108 = vadd.f32 %v589, %v1107
      %v1109 = vpop.f32.mrf.mxu0
      %v1110 = vadd.f32 %v594, %v1109
      %1111 = vmatmul.bf16.gmra.mxu0 %v936
      %v1112 = vpop.f32.mrf.mxu0
      %v1113 = vadd.f32 %v599, %v1112
      %v1114 = vpop.f32.mrf.mxu0
      %v1115 = vadd.f32 %v604, %v1114
      %1116 = vmatmul.bf16.gmra.mxu0 %v940
      %v1117 = vpop.f32.mrf.mxu0
      %v1118 = vadd.f32 %v609, %v1117
      %v1119 = vpop.f32.mrf.mxu0
      %v1120 = vadd.f32 %v614, %v1119
      %1121 = vmatmul.bf16.gmra.mxu0 %v944
      %v1122 = vpop.f32.mrf.mxu0
      %v1123 = vadd.f32 %v619, %v1122
      %v1124 = vpop.f32.mrf.mxu0
      %v1125 = vadd.f32 %v624, %v1124
      %1126 = vmatmul.bf16.gmra.mxu0 %v948
      %v1127 = vpop.f32.mrf.mxu0
      %v1128 = vadd.f32 %v629, %v1127
      %v1129 = vpop.f32.mrf.mxu0
      %v1130 = vadd.f32 %v634, %v1129
      %1131 = vmatmul.bf16.gmra.mxu0 %v952
      %v1132 = vpop.f32.mrf.mxu0
      %v1133 = vadd.f32 %v639, %v1132
      %v1134 = vpop.f32.mrf.mxu0
      %v1135 = vadd.f32 %v644, %v1134
      %1136 = vmatmul.bf16.gmra.mxu0 %v956
      %v1137 = vpop.f32.mrf.mxu0
      %v1138 = vadd.f32 %v649, %v1137
      %v1139 = vpop.f32.mrf.mxu0
      %v1140 = vadd.f32 %v654, %v1139
      %1141 = vmatmul.bf16.gmra.mxu0 %v960
      %v1142 = vpop.f32.mrf.mxu0
      %v1143 = vadd.f32 %v659, %v1142
      %v1144 = vpop.f32.mrf.mxu0
      %v1145 = vadd.f32 %v664, %v1144
      %1146 = vmatmul.bf16.gmra.mxu0 %v964
      %v1147 = vpop.f32.mrf.mxu0
      %v1148 = vadd.f32 %v669, %v1147
      %v1149 = vpop.f32.mrf.mxu0
      %v1150 = vadd.f32 %v674, %v1149
      %1151 = vmatmul.bf16.gmra.mxu0 %v968
      %v1152 = vpop.f32.mrf.mxu0
      %v1153 = vadd.f32 %v679, %v1152
      %v1154 = vpop.f32.mrf.mxu0
      %v1155 = vadd.f32 %v684, %v1154
      %1156 = vmatmul.bf16.gmra.mxu0 %v972
      %v1157 = vpop.f32.mrf.mxu0
      %v1158 = vadd.f32 %v689, %v1157
      %v1159 = vpop.f32.mrf.mxu0
      %v1160 = vadd.f32 %v694, %v1159
      %1161 = vmatmul.bf16.gmra.mxu0 %v976
      %v1162 = vpop.f32.mrf.mxu0
      %v1163 = vadd.f32 %v699, %v1162
      %v1164 = vpop.f32.mrf.mxu0
      %v1165 = vadd.f32 %v704, %v1164
      %1166 = vmatmul.bf16.gmra.mxu0 %v980
      %v1167 = vpop.f32.mrf.mxu0
      %v1168 = vadd.f32 %v709, %v1167
      %v1169 = vpop.f32.mrf.mxu0
      %v1170 = vadd.f32 %v714, %v1169
      %1171 = vmatmul.bf16.gmra.mxu0 %v984
      %v1172 = vpop.f32.mrf.mxu0
      %v1173 = vadd.f32 %v719, %v1172
      %v1174 = vpop.f32.mrf.mxu0
      %v1175 = vadd.f32 %v724, %v1174
      %1176 = vmatmul.bf16.gmra.mxu0 %v988
      %v1177 = vpop.f32.mrf.mxu0
      %v1178 = vadd.f32 %v729, %v1177
      %v1179 = vpop.f32.mrf.mxu0
      %v1180 = vadd.f32 %v734, %v1179
      %1181 = vdwg.mxu0
      %1182 = vmatpush.bf16.msra.mxu0 %v463
      %1183 = vmatpush.bf16.msra.mxu0 %v462
      %1184 = vmatpush.bf16.msra.mxu0 %v461
      %1185 = vmatpush.bf16.msra.mxu0 %v460
      %1186 = vmatpush.bf16.msra.mxu0 %v459
      %1187 = vmatpush.bf16.msra.mxu0 %v458
      %1188 = vmatpush.bf16.msra.mxu0 %v457
      %1189 = vmatpush.bf16.msra.mxu0 %v456
      %1190 = vmatmul.bf16.gmra.mxu0 %v929
      %v1191 = vpop.f32.mrf.mxu0
      %v1192 = vadd.f32 %v1103, %v1191
      %v1193 = vpop.f32.mrf.mxu0
      %v1194 = vadd.f32 %v1105, %v1193
      %1195 = vmatmul.bf16.gmra.mxu0 %v933
      %v1196 = vpop.f32.mrf.mxu0
      %v1197 = vadd.f32 %v1108, %v1196
      %v1198 = vpop.f32.mrf.mxu0
      %v1199 = vadd.f32 %v1110, %v1198
      %1200 = vmatmul.bf16.gmra.mxu0 %v937
      %v1201 = vpop.f32.mrf.mxu0
      %v1202 = vadd.f32 %v1113, %v1201
      %v1203 = vpop.f32.mrf.mxu0
      %v1204 = vadd.f32 %v1115, %v1203
      %1205 = vmatmul.bf16.gmra.mxu0 %v941
      %v1206 = vpop.f32.mrf.mxu0
      %v1207 = vadd.f32 %v1118, %v1206
      %v1208 = vpop.f32.mrf.mxu0
      %v1209 = vadd.f32 %v1120, %v1208
      %1210 = vmatmul.bf16.gmra.mxu0 %v945
      %v1211 = vpop.f32.mrf.mxu0
      %v1212 = vadd.f32 %v1123, %v1211
      %v1213 = vpop.f32.mrf.mxu0
      %v1214 = vadd.f32 %v1125, %v1213
      %1215 = vmatmul.bf16.gmra.mxu0 %v949
      %v1216 = vpop.f32.mrf.mxu0
      %v1217 = vadd.f32 %v1128, %v1216
      %v1218 = vpop.f32.mrf.mxu0
      %v1219 = vadd.f32 %v1130, %v1218
      %1220 = vmatmul.bf16.gmra.mxu0 %v953
      %v1221 = vpop.f32.mrf.mxu0
      %v1222 = vadd.f32 %v1133, %v1221
      %v1223 = vpop.f32.mrf.mxu0
      %v1224 = vadd.f32 %v1135, %v1223
      %1225 = vmatmul.bf16.gmra.mxu0 %v957
      %v1226 = vpop.f32.mrf.mxu0
      %v1227 = vadd.f32 %v1138, %v1226
      %v1228 = vpop.f32.mrf.mxu0
      %v1229 = vadd.f32 %v1140, %v1228
      %1230 = vmatmul.bf16.gmra.mxu0 %v961
      %v1231 = vpop.f32.mrf.mxu0
      %v1232 = vadd.f32 %v1143, %v1231
      %v1233 = vpop.f32.mrf.mxu0
      %v1234 = vadd.f32 %v1145, %v1233
      %1235 = vmatmul.bf16.gmra.mxu0 %v965
      %v1236 = vpop.f32.mrf.mxu0
      %v1237 = vadd.f32 %v1148, %v1236
      %v1238 = vpop.f32.mrf.mxu0
      %v1239 = vadd.f32 %v1150, %v1238
      %1240 = vmatmul.bf16.gmra.mxu0 %v969
      %v1241 = vpop.f32.mrf.mxu0
      %v1242 = vadd.f32 %v1153, %v1241
      %v1243 = vpop.f32.mrf.mxu0
      %v1244 = vadd.f32 %v1155, %v1243
      %1245 = vmatmul.bf16.gmra.mxu0 %v973
      %v1246 = vpop.f32.mrf.mxu0
      %v1247 = vadd.f32 %v1158, %v1246
      %v1248 = vpop.f32.mrf.mxu0
      %v1249 = vadd.f32 %v1160, %v1248
      %1250 = vmatmul.bf16.gmra.mxu0 %v977
      %v1251 = vpop.f32.mrf.mxu0
      %v1252 = vadd.f32 %v1163, %v1251
      %v1253 = vpop.f32.mrf.mxu0
      %v1254 = vadd.f32 %v1165, %v1253
      %1255 = vmatmul.bf16.gmra.mxu0 %v981
      %v1256 = vpop.f32.mrf.mxu0
      %v1257 = vadd.f32 %v1168, %v1256
      %v1258 = vpop.f32.mrf.mxu0
      %v1259 = vadd.f32 %v1170, %v1258
      %1260 = vmatmul.bf16.gmra.mxu0 %v985
      %v1261 = vpop.f32.mrf.mxu0
      %v1262 = vadd.f32 %v1173, %v1261
      %v1263 = vpop.f32.mrf.mxu0
      %v1264 = vadd.f32 %v1175, %v1263
      %1265 = vmatmul.bf16.gmra.mxu0 %v989
      %v1266 = vpop.f32.mrf.mxu0
      %v1267 = vadd.f32 %v1178, %v1266
      %v1268 = vpop.f32.mrf.mxu0
      %v1269 = vadd.f32 %v1180, %v1268
      %1270 = vdwg.mxu0
      %1271 = vmatpush.bf16.msra.mxu0 %v471
      %1272 = vmatpush.bf16.msra.mxu0 %v470
      %1273 = vmatpush.bf16.msra.mxu0 %v469
      %1274 = vmatpush.bf16.msra.mxu0 %v468
      %1275 = vmatpush.bf16.msra.mxu0 %v467
      %1276 = vmatpush.bf16.msra.mxu0 %v466
      %1277 = vmatpush.bf16.msra.mxu0 %v465
      %1278 = vmatpush.bf16.msra.mxu0 %v464
      %1279 = vmatmul.bf16.gmra.mxu0 %v930
      %v1280 = vpop.f32.mrf.mxu0
      %v1281 = vadd.f32 %v1192, %v1280
      %v1282 = vpop.f32.mrf.mxu0
      %v1283 = vadd.f32 %v1194, %v1282
      %1284 = vmatmul.bf16.gmra.mxu0 %v934
      %v1285 = vpop.f32.mrf.mxu0
      %v1286 = vadd.f32 %v1197, %v1285
      %v1287 = vpop.f32.mrf.mxu0
      %v1288 = vadd.f32 %v1199, %v1287
      %1289 = vmatmul.bf16.gmra.mxu0 %v938
      %v1290 = vpop.f32.mrf.mxu0
      %v1291 = vadd.f32 %v1202, %v1290
      %v1292 = vpop.f32.mrf.mxu0
      %v1293 = vadd.f32 %v1204, %v1292
      %1294 = vmatmul.bf16.gmra.mxu0 %v942
      %v1295 = vpop.f32.mrf.mxu0
      %v1296 = vadd.f32 %v1207, %v1295
      %v1297 = vpop.f32.mrf.mxu0
      %v1298 = vadd.f32 %v1209, %v1297
      %1299 = vmatmul.bf16.gmra.mxu0 %v946
      %v1300 = vpop.f32.mrf.mxu0
      %v1301 = vadd.f32 %v1212, %v1300
      %v1302 = vpop.f32.mrf.mxu0
      %v1303 = vadd.f32 %v1214, %v1302
      %1304 = vmatmul.bf16.gmra.mxu0 %v950
      %v1305 = vpop.f32.mrf.mxu0
      %v1306 = vadd.f32 %v1217, %v1305
      %v1307 = vpop.f32.mrf.mxu0
      %v1308 = vadd.f32 %v1219, %v1307
      %1309 = vmatmul.bf16.gmra.mxu0 %v954
      %v1310 = vpop.f32.mrf.mxu0
      %v1311 = vadd.f32 %v1222, %v1310
      %v1312 = vpop.f32.mrf.mxu0
      %v1313 = vadd.f32 %v1224, %v1312
      %1314 = vmatmul.bf16.gmra.mxu0 %v958
      %v1315 = vpop.f32.mrf.mxu0
      %v1316 = vadd.f32 %v1227, %v1315
      %v1317 = vpop.f32.mrf.mxu0
      %v1318 = vadd.f32 %v1229, %v1317
      %1319 = vmatmul.bf16.gmra.mxu0 %v962
      %v1320 = vpop.f32.mrf.mxu0
      %v1321 = vadd.f32 %v1232, %v1320
      %v1322 = vpop.f32.mrf.mxu0
      %v1323 = vadd.f32 %v1234, %v1322
      %1324 = vmatmul.bf16.gmra.mxu0 %v966
      %v1325 = vpop.f32.mrf.mxu0
      %v1326 = vadd.f32 %v1237, %v1325
      %v1327 = vpop.f32.mrf.mxu0
      %v1328 = vadd.f32 %v1239, %v1327
      %1329 = vmatmul.bf16.gmra.mxu0 %v970
      %v1330 = vpop.f32.mrf.mxu0
      %v1331 = vadd.f32 %v1242, %v1330
      %v1332 = vpop.f32.mrf.mxu0
      %v1333 = vadd.f32 %v1244, %v1332
      %1334 = vmatmul.bf16.gmra.mxu0 %v974
      %v1335 = vpop.f32.mrf.mxu0
      %v1336 = vadd.f32 %v1247, %v1335
      %v1337 = vpop.f32.mrf.mxu0
      %v1338 = vadd.f32 %v1249, %v1337
      %1339 = vmatmul.bf16.gmra.mxu0 %v978
      %v1340 = vpop.f32.mrf.mxu0
      %v1341 = vadd.f32 %v1252, %v1340
      %v1342 = vpop.f32.mrf.mxu0
      %v1343 = vadd.f32 %v1254, %v1342
      %1344 = vmatmul.bf16.gmra.mxu0 %v982
      %v1345 = vpop.f32.mrf.mxu0
      %v1346 = vadd.f32 %v1257, %v1345
      %v1347 = vpop.f32.mrf.mxu0
      %v1348 = vadd.f32 %v1259, %v1347
      %1349 = vmatmul.bf16.gmra.mxu0 %v986
      %v1350 = vpop.f32.mrf.mxu0
      %v1351 = vadd.f32 %v1262, %v1350
      %v1352 = vpop.f32.mrf.mxu0
      %v1353 = vadd.f32 %v1264, %v1352
      %1354 = vmatmul.bf16.gmra.mxu0 %v990
      %v1355 = vpop.f32.mrf.mxu0
      %v1356 = vadd.f32 %v1267, %v1355
      %v1357 = vpop.f32.mrf.mxu0
      %v1358 = vadd.f32 %v1269, %v1357
      %1359 = vdwg.mxu0
      %1360 = vmatpush.bf16.msra.mxu0 %v1091
      %1361 = vmatpush.bf16.msra.mxu0 %v478
      %1362 = vmatpush.bf16.msra.mxu0 %v477
      %1363 = vmatpush.bf16.msra.mxu0 %v476
      %1364 = vmatpush.bf16.msra.mxu0 %v475
      %1365 = vmatpush.bf16.msra.mxu0 %v474
      %1366 = vmatpush.bf16.msra.mxu0 %v473
      %1367 = vmatpush.bf16.msra.mxu0 %v472
      %1368 = vmatmul.bf16.gmra.mxu0 %v1042
      %v1369 = vpop.f32.mrf.mxu0
      %v1370 = vadd.f32 %v1281, %v1369
      %v1371 = vpop.f32.mrf.mxu0
      %v1372 = vadd.f32 %v1283, %v1371
      %1373 = vmatmul.bf16.gmra.mxu0 %v1045
      %v1374 = vpop.f32.mrf.mxu0
      %v1375 = vadd.f32 %v1286, %v1374
      %v1376 = vpop.f32.mrf.mxu0
      %v1377 = vadd.f32 %v1288, %v1376
      %1378 = vmatmul.bf16.gmra.mxu0 %v1048
      %v1379 = vpop.f32.mrf.mxu0
      %v1380 = vadd.f32 %v1291, %v1379
      %v1381 = vpop.f32.mrf.mxu0
      %v1382 = vadd.f32 %v1293, %v1381
      %1383 = vmatmul.bf16.gmra.mxu0 %v1051
      %v1384 = vpop.f32.mrf.mxu0
      %v1385 = vadd.f32 %v1296, %v1384
      %v1386 = vpop.f32.mrf.mxu0
      %v1387 = vadd.f32 %v1298, %v1386
      %1388 = vmatmul.bf16.gmra.mxu0 %v1054
      %v1389 = vpop.f32.mrf.mxu0
      %v1390 = vadd.f32 %v1301, %v1389
      %v1391 = vpop.f32.mrf.mxu0
      %v1392 = vadd.f32 %v1303, %v1391
      %1393 = vmatmul.bf16.gmra.mxu0 %v1057
      %v1394 = vpop.f32.mrf.mxu0
      %v1395 = vadd.f32 %v1306, %v1394
      %v1396 = vpop.f32.mrf.mxu0
      %v1397 = vadd.f32 %v1308, %v1396
      %1398 = vmatmul.bf16.gmra.mxu0 %v1060
      %v1399 = vpop.f32.mrf.mxu0
      %v1400 = vadd.f32 %v1311, %v1399
      %v1401 = vpop.f32.mrf.mxu0
      %v1402 = vadd.f32 %v1313, %v1401
      %1403 = vmatmul.bf16.gmra.mxu0 %v1063
      %v1404 = vpop.f32.mrf.mxu0
      %v1405 = vadd.f32 %v1316, %v1404
      %v1406 = vpop.f32.mrf.mxu0
      %v1407 = vadd.f32 %v1318, %v1406
      %1408 = vmatmul.bf16.gmra.mxu0 %v1066
      %v1409 = vpop.f32.mrf.mxu0
      %v1410 = vadd.f32 %v1321, %v1409
      %v1411 = vpop.f32.mrf.mxu0
      %v1412 = vadd.f32 %v1323, %v1411
      %1413 = vmatmul.bf16.gmra.mxu0 %v1069
      %v1414 = vpop.f32.mrf.mxu0
      %v1415 = vadd.f32 %v1326, %v1414
      %v1416 = vpop.f32.mrf.mxu0
      %v1417 = vadd.f32 %v1328, %v1416
      %1418 = vmatmul.bf16.gmra.mxu0 %v1072
      %v1419 = vpop.f32.mrf.mxu0
      %v1420 = vadd.f32 %v1331, %v1419
      %v1421 = vpop.f32.mrf.mxu0
      %v1422 = vadd.f32 %v1333, %v1421
      %1423 = vmatmul.bf16.gmra.mxu0 %v1075
      %v1424 = vpop.f32.mrf.mxu0
      %v1425 = vadd.f32 %v1336, %v1424
      %v1426 = vpop.f32.mrf.mxu0
      %v1427 = vadd.f32 %v1338, %v1426
      %1428 = vmatmul.bf16.gmra.mxu0 %v1078
      %v1429 = vpop.f32.mrf.mxu0
      %v1430 = vadd.f32 %v1341, %v1429
      %v1431 = vpop.f32.mrf.mxu0
      %v1432 = vadd.f32 %v1343, %v1431
      %1433 = vmatmul.bf16.gmra.mxu0 %v1081
      %v1434 = vpop.f32.mrf.mxu0
      %v1435 = vadd.f32 %v1346, %v1434
      %v1436 = vpop.f32.mrf.mxu0
      %v1437 = vadd.f32 %v1348, %v1436
      %1438 = vmatmul.bf16.gmra.mxu0 %v1084
      %v1439 = vpop.f32.mrf.mxu0
      %v1440 = vadd.f32 %v1351, %v1439
      %v1441 = vpop.f32.mrf.mxu0
      %v1442 = vadd.f32 %v1353, %v1441
      %1443 = vmatmul.bf16.gmra.mxu0 %v1087
      %v1444 = vpop.f32.mrf.mxu0
      %v1445 = vadd.f32 %v1356, %v1444
      %v1446 = vpop.f32.mrf.mxu0
      %v1447 = vadd.f32 %v1358, %v1446
      %1448 = vdwg.mxu0
      %v1449 = vmax.f32 %v1370, 0.0
      %v1450 = vmax.f32 %v1372, 0.0
      %v1451 = vmax.f32 %v1375, 0.0
      %v1452 = vmax.f32 %v1377, 0.0
      %v1453 = vmax.f32 %v1380, 0.0
      %v1454 = vmax.f32 %v1382, 0.0
      %v1455 = vmax.f32 %v1385, 0.0
      %v1456 = vmax.f32 %v1387, 0.0
      %v1457 = vmax.f32 %v1390, 0.0
      %v1458 = vmax.f32 %v1392, 0.0
      %v1459 = vmax.f32 %v1395, 0.0
      %v1460 = vmax.f32 %v1397, 0.0
      %v1461 = vmax.f32 %v1400, 0.0
      %v1462 = vmax.f32 %v1402, 0.0
      %v1463 = vmax.f32 %v1405, 0.0
      %v1464 = vmax.f32 %v1407, 0.0
      %v1465 = vmax.f32 %v1410, 0.0
      %v1466 = vmax.f32 %v1412, 0.0
      %v1467 = vmax.f32 %v1415, 0.0
      %v1468 = vmax.f32 %v1417, 0.0
      %v1469 = vmax.f32 %v1420, 0.0
      %v1470 = vmax.f32 %v1422, 0.0
      %v1471 = vmax.f32 %v1425, 0.0
      %v1472 = vmax.f32 %v1427, 0.0
      %v1473 = vmax.f32 %v1430, 0.0
      %v1474 = vmax.f32 %v1432, 0.0
      %v1475 = vmax.f32 %v1435, 0.0
      %v1476 = vmax.f32 %v1437, 0.0
      %v1477 = vmax.f32 %v1440, 0.0
      %v1478 = vmax.f32 %v1442, 0.0
      %v1479 = vmax.f32 %v1445, 0.0
      %v1480 = vmax.f32 %v1447, 0.0
      %v1481 = vld [vmem:[%s3] sm:$0xff]
      %v1482 = vld [vmem:[%s3 + $0x8] sm:$0xff]
      %v1483 = vld [vmem:[%s3 + $0x10] sm:$0xff]
      %v1484 = vld [vmem:[%s3 + $0x18] sm:$0xff]
      %v1485 = vld [vmem:[%s3 + $0x20] sm:$0xff]
      %v1486 = vld [vmem:[%s3 + $0x28] sm:$0xff]
      %v1487 = vld [vmem:[%s3 + $0x30] sm:$0xff]
      %v1488 = vld [vmem:[%s3 + $0x38] sm:$0xff]
      %v1489 = vld [vmem:[%s3 + $0x40] sm:$0xff]
      %v1490 = vld [vmem:[%s3 + $0x48] sm:$0xff]
      %v1491 = vld [vmem:[%s3 + $0x50] sm:$0xff]
      %v1492 = vld [vmem:[%s3 + $0x58] sm:$0xff]
      %v1493 = vld [vmem:[%s3 + $0x60] sm:$0xff]
      %v1494 = vld [vmem:[%s3 + $0x68] sm:$0xff]
      %v1495 = vld [vmem:[%s3 + $0x70] sm:$0xff]
      %v1496 = vld [vmem:[%s3 + $0x78] sm:$0xff]
      %v1497 = vld [vmem:[%s3 + $0x80] sm:$0xff]
      %v1498 = vld [vmem:[%s3 + $0x88] sm:$0xff]
      %v1499 = vld [vmem:[%s3 + $0x90] sm:$0xff]
      %v1500 = vld [vmem:[%s3 + $0x98] sm:$0xff]
      %v1501 = vld [vmem:[%s3 + $0xa0] sm:$0xff]
      %v1502 = vld [vmem:[%s3 + $0xa8] sm:$0xff]
      %v1503 = vld [vmem:[%s3 + $0xb0] sm:$0xff]
      %v1504 = vld [vmem:[%s3 + $0xb8] sm:$0xff]
      %v1505 = vld [vmem:[%s3 + $0xc0] sm:$0xff]
      %v1506 = vld [vmem:[%s3 + $0xc8] sm:$0xff]
      %v1507 = vld [vmem:[%s3 + $0xd0] sm:$0xff]
      %v1508 = vld [vmem:[%s3 + $0xd8] sm:$0xff]
      %v1509 = vld [vmem:[%s3 + $0xe0] sm:$0xff]
      %v1510 = vld [vmem:[%s3 + $0xe8] sm:$0xff]
      %v1511 = vld [vmem:[%s3 + $0xf0] sm:$0xff]
      %v1512 = vld [vmem:[%s3 + $0xf8] sm:$0xff]
      %v1513 = vld [vmem:[%s4] sm:$0xff]
      %v1514 = vld [vmem:[%s4 + $0x8] sm:$0xff]
      %v1515 = vld [vmem:[%s4 + $0x10] sm:$0xff]
      %v1516 = vld [vmem:[%s4 + $0x18] sm:$0xff]
      %v1517 = vld [vmem:[%s4 + $0x20] sm:$0xff]
      %v1518 = vld [vmem:[%s4 + $0x28] sm:$0xff]
      %v1519 = vld [vmem:[%s4 + $0x30] sm:$0xff]
      %v1520 = vld [vmem:[%s4 + $0x38] sm:$0xff]
      %v1521 = vld [vmem:[%s4 + $0x40] sm:$0xff]
      %v1522 = vld [vmem:[%s4 + $0x48] sm:$0xff]
      %v1523 = vld [vmem:[%s4 + $0x50] sm:$0xff]
      %v1524 = vld [vmem:[%s4 + $0x58] sm:$0xff]
      %v1525 = vld [vmem:[%s4 + $0x60] sm:$0xff]
      %v1526 = vld [vmem:[%s4 + $0x68] sm:$0xff]
      %v1527 = vld [vmem:[%s4 + $0x70] sm:$0xff]
      %v1528 = vld [vmem:[%s4 + $0x78] sm:$0xff]
      %v1529 = vld [vmem:[%s4 + $0x80] sm:$0xff]
      %v1530 = vld [vmem:[%s4 + $0x88] sm:$0xff]
      %v1531 = vld [vmem:[%s4 + $0x90] sm:$0xff]
      %v1532 = vld [vmem:[%s4 + $0x98] sm:$0xff]
      %v1533 = vld [vmem:[%s4 + $0xa0] sm:$0xff]
      %v1534 = vld [vmem:[%s4 + $0xa8] sm:$0xff]
      %v1535 = vld [vmem:[%s4 + $0xb0] sm:$0xff]
      %v1536 = vld [vmem:[%s4 + $0xb8] sm:$0xff]
      %v1537 = vld [vmem:[%s4 + $0xc0] sm:$0xff]
      %v1538 = vld [vmem:[%s4 + $0xc8] sm:$0xff]
      %v1539 = vld [vmem:[%s4 + $0xd0] sm:$0xff]
      %v1540 = vld [vmem:[%s4 + $0xd8] sm:$0xff]
      %v1541 = vld [vmem:[%s4 + $0xe0] sm:$0xff]
      %v1542 = vld [vmem:[%s4 + $0xe8] sm:$0xff]
      %v1543 = vld [vmem:[%s4 + $0xf0] sm:$0xff]
      %v1544 = vld [vmem:[%s4 + $0xf8] sm:$0xff]
      %v1545 = vpack.c.bf16 %v1450, %v1449
      %v1546 = vpack.c.bf16 %v1452, %v1451
      %v1547 = vpack.c.bf16 %v1454, %v1453
      %v1548 = vpack.c.bf16 %v1456, %v1455
      %v1549 = vpack.c.bf16 %v1458, %v1457
      %v1550 = vpack.c.bf16 %v1460, %v1459
      %v1551 = vpack.c.bf16 %v1462, %v1461
      %v1552 = vpack.c.bf16 %v1464, %v1463
      %v1553 = vpack.c.bf16 %v1466, %v1465
      %v1554 = vpack.c.bf16 %v1468, %v1467
      %v1555 = vpack.c.bf16 %v1470, %v1469
      %v1556 = vpack.c.bf16 %v1472, %v1471
      %v1557 = vpack.c.bf16 %v1474, %v1473
      %v1558 = vpack.c.bf16 %v1476, %v1475
      %v1559 = vpack.c.bf16 %v1478, %v1477
      %v1560 = vpack.c.bf16 %v1480, %v1479
      %1562 = vset.pattern.permute.xlu0 0
      %1563 = vperm.xlu0 %1562, %v1513
      %v1564 = vpop.permute.xlu0 %1563
      %1567 = vset.pattern.permute.xlu0 0
      %1568 = vperm.xlu0 %1567, %v1514
      %v1569 = vpop.permute.xlu0 %1568
      %1572 = vset.pattern.permute.xlu0 0
      %1573 = vperm.xlu0 %1572, %v1515
      %v1574 = vpop.permute.xlu0 %1573
      %1577 = vset.pattern.permute.xlu0 0
      %1578 = vperm.xlu0 %1577, %v1516
      %v1579 = vpop.permute.xlu0 %1578
      %1582 = vset.pattern.permute.xlu0 0
      %1583 = vperm.xlu0 %1582, %v1517
      %v1584 = vpop.permute.xlu0 %1583
      %1587 = vset.pattern.permute.xlu0 0
      %1588 = vperm.xlu0 %1587, %v1518
      %v1589 = vpop.permute.xlu0 %1588
      %1592 = vset.pattern.permute.xlu0 0
      %1593 = vperm.xlu0 %1592, %v1519
      %v1594 = vpop.permute.xlu0 %1593
      %1597 = vset.pattern.permute.xlu0 0
      %1598 = vperm.xlu0 %1597, %v1520
      %v1599 = vpop.permute.xlu0 %1598
      %1602 = vset.pattern.permute.xlu0 0
      %1603 = vperm.xlu0 %1602, %v1521
      %v1604 = vpop.permute.xlu0 %1603
      %1607 = vset.pattern.permute.xlu0 0
      %1608 = vperm.xlu0 %1607, %v1522
      %v1609 = vpop.permute.xlu0 %1608
      %1612 = vset.pattern.permute.xlu0 0
      %1613 = vperm.xlu0 %1612, %v1523
      %v1614 = vpop.permute.xlu0 %1613
      %1617 = vset.pattern.permute.xlu0 0
      %1618 = vperm.xlu0 %1617, %v1524
      %v1619 = vpop.permute.xlu0 %1618
      %1622 = vset.pattern.permute.xlu0 0
      %1623 = vperm.xlu0 %1622, %v1525
      %v1624 = vpop.permute.xlu0 %1623
      %1627 = vset.pattern.permute.xlu0 0
      %1628 = vperm.xlu0 %1627, %v1526
      %v1629 = vpop.permute.xlu0 %1628
      %1632 = vset.pattern.permute.xlu0 0
      %1633 = vperm.xlu0 %1632, %v1527
      %v1634 = vpop.permute.xlu0 %1633
      %1637 = vset.pattern.permute.xlu0 0
      %1638 = vperm.xlu0 %1637, %v1528
      %v1639 = vpop.permute.xlu0 %1638
      %1642 = vset.pattern.permute.xlu0 0
      %1643 = vperm.xlu0 %1642, %v1529
      %v1644 = vpop.permute.xlu0 %1643
      %1647 = vset.pattern.permute.xlu0 0
      %1648 = vperm.xlu0 %1647, %v1530
      %v1649 = vpop.permute.xlu0 %1648
      %1652 = vset.pattern.permute.xlu0 0
      %1653 = vperm.xlu0 %1652, %v1531
      %v1654 = vpop.permute.xlu0 %1653
      %1657 = vset.pattern.permute.xlu0 0
      %1658 = vperm.xlu0 %1657, %v1532
      %v1659 = vpop.permute.xlu0 %1658
      %1662 = vset.pattern.permute.xlu0 0
      %1663 = vperm.xlu0 %1662, %v1533
      %v1664 = vpop.permute.xlu0 %1663
      %1667 = vset.pattern.permute.xlu0 0
      %1668 = vperm.xlu0 %1667, %v1534
      %v1669 = vpop.permute.xlu0 %1668
      %1672 = vset.pattern.permute.xlu0 0
      %1673 = vperm.xlu0 %1672, %v1535
      %v1674 = vpop.permute.xlu0 %1673
      %1677 = vset.pattern.permute.xlu0 0
      %1678 = vperm.xlu0 %1677, %v1536
      %v1679 = vpop.permute.xlu0 %1678
      %1682 = vset.pattern.permute.xlu0 0
      %1683 = vperm.xlu0 %1682, %v1537
      %v1684 = vpop.permute.xlu0 %1683
      %1687 = vset.pattern.permute.xlu0 0
      %1688 = vperm.xlu0 %1687, %v1538
      %v1689 = vpop.permute.xlu0 %1688
      %1692 = vset.pattern.permute.xlu0 0
      %1693 = vperm.xlu0 %1692, %v1539
      %v1694 = vpop.permute.xlu0 %1693
      %1697 = vset.pattern.permute.xlu0 0
      %1698 = vperm.xlu0 %1697, %v1540
      %v1699 = vpop.permute.xlu0 %1698
      %1702 = vset.pattern.permute.xlu0 0
      %1703 = vperm.xlu0 %1702, %v1541
      %v1704 = vpop.permute.xlu0 %1703
      %1707 = vset.pattern.permute.xlu0 0
      %1708 = vperm.xlu0 %1707, %v1542
      %v1709 = vpop.permute.xlu0 %1708
      %1712 = vset.pattern.permute.xlu0 0
      %1713 = vperm.xlu0 %1712, %v1543
      %v1714 = vpop.permute.xlu0 %1713
      %1717 = vset.pattern.permute.xlu0 0
      %1718 = vperm.xlu0 %1717, %v1544
      %v1719 = vpop.permute.xlu0 %1718
      %v1753 = vunpack.c.l.b16 %v1481
      %v1754 = vunpack.c.h.b16 %v1481
      %v1755 = vunpack.c.l.b16 %v1482
      %v1756 = vunpack.c.h.b16 %v1482
      %v1757 = vunpack.c.l.b16 %v1483
      %v1758 = vunpack.c.h.b16 %v1483
      %v1759 = vunpack.c.l.b16 %v1484
      %v1760 = vunpack.c.h.b16 %v1484
      %v1761 = vunpack.c.l.b16 %v1485
      %v1762 = vunpack.c.h.b16 %v1485
      %v1763 = vunpack.c.l.b16 %v1486
      %v1764 = vunpack.c.h.b16 %v1486
      %v1765 = vunpack.c.l.b16 %v1487
      %v1766 = vunpack.c.h.b16 %v1487
      %v1767 = vunpack.c.l.b16 %v1488
      %v1768 = vunpack.c.h.b16 %v1488
      %v1769 = vunpack.c.l.b16 %v1489
      %v1770 = vunpack.c.h.b16 %v1489
      %v1771 = vunpack.c.l.b16 %v1490
      %v1772 = vunpack.c.h.b16 %v1490
      %v1773 = vunpack.c.l.b16 %v1491
      %v1774 = vunpack.c.h.b16 %v1491
      %v1775 = vunpack.c.l.b16 %v1492
      %v1776 = vunpack.c.h.b16 %v1492
      %v1777 = vunpack.c.l.b16 %v1493
      %v1778 = vunpack.c.h.b16 %v1493
      %v1779 = vunpack.c.l.b16 %v1494
      %v1780 = vunpack.c.h.b16 %v1494
      %v1781 = vunpack.c.l.b16 %v1495
      %v1782 = vunpack.c.h.b16 %v1495
      %v1783 = vunpack.c.l.b16 %v1496
      %v1784 = vunpack.c.h.b16 %v1496
      %v1785 = vunpack.c.l.b16 %v1497
      %v1786 = vunpack.c.h.b16 %v1497
      %v1787 = vunpack.c.l.b16 %v1498
      %v1788 = vunpack.c.h.b16 %v1498
      %v1789 = vunpack.c.l.b16 %v1499
      %v1790 = vunpack.c.h.b16 %v1499
      %v1791 = vunpack.c.l.b16 %v1500
      %v1792 = vunpack.c.h.b16 %v1500
      %v1793 = vunpack.c.l.b16 %v1501
      %v1794 = vunpack.c.h.b16 %v1501
      %v1795 = vunpack.c.l.b16 %v1502
      %v1796 = vunpack.c.h.b16 %v1502
      %v1797 = vunpack.c.l.b16 %v1503
      %v1798 = vunpack.c.h.b16 %v1503
      %v1799 = vunpack.c.l.b16 %v1504
      %v1800 = vunpack.c.h.b16 %v1504
      %v1801 = vunpack.c.l.b16 %v1505
      %v1802 = vunpack.c.h.b16 %v1505
      %v1803 = vunpack.c.l.b16 %v1506
      %v1804 = vunpack.c.h.b16 %v1506
      %v1805 = vunpack.c.l.b16 %v1507
      %v1806 = vunpack.c.h.b16 %v1507
      %v1807 = vunpack.c.l.b16 %v1508
      %v1808 = vunpack.c.h.b16 %v1508
      %v1809 = vunpack.c.l.b16 %v1509
      %v1810 = vunpack.c.h.b16 %v1509
      %v1811 = vunpack.c.l.b16 %v1510
      %v1812 = vunpack.c.h.b16 %v1510
      %v1813 = vunpack.c.l.b16 %v1511
      %v1814 = vunpack.c.h.b16 %v1511
      %v1815 = vunpack.c.l.b16 %v1512
      %v1816 = vunpack.c.h.b16 %v1512
      %v1817 = vpack.c.b16 %v1755, %v1753
      %v1818 = vpack.c.b16 %v1756, %v1754
      %v1819 = vpack.c.b16 %v1759, %v1757
      %v1820 = vpack.c.b16 %v1760, %v1758
      %v1821 = vpack.c.b16 %v1763, %v1761
      %v1822 = vpack.c.b16 %v1764, %v1762
      %v1823 = vpack.c.b16 %v1767, %v1765
      %v1824 = vpack.c.b16 %v1768, %v1766
      %v1825 = vpack.c.b16 %v1771, %v1769
      %v1826 = vpack.c.b16 %v1772, %v1770
      %v1827 = vpack.c.b16 %v1775, %v1773
      %v1828 = vpack.c.b16 %v1776, %v1774
      %v1829 = vpack.c.b16 %v1779, %v1777
      %v1830 = vpack.c.b16 %v1780, %v1778
      %v1831 = vpack.c.b16 %v1783, %v1781
      %v1832 = vpack.c.b16 %v1784, %v1782
      %v1833 = vpack.c.b16 %v1787, %v1785
      %v1834 = vpack.c.b16 %v1788, %v1786
      %v1835 = vpack.c.b16 %v1791, %v1789
      %v1836 = vpack.c.b16 %v1792, %v1790
      %v1837 = vpack.c.b16 %v1795, %v1793
      %v1838 = vpack.c.b16 %v1796, %v1794
      %v1839 = vpack.c.b16 %v1799, %v1797
      %v1840 = vpack.c.b16 %v1800, %v1798
      %v1841 = vpack.c.b16 %v1803, %v1801
      %v1842 = vpack.c.b16 %v1804, %v1802
      %v1843 = vpack.c.b16 %v1807, %v1805
      %v1844 = vpack.c.b16 %v1808, %v1806
      %v1845 = vpack.c.b16 %v1811, %v1809
      %v1846 = vpack.c.b16 %v1812, %v1810
      %v1847 = vpack.c.b16 %v1815, %v1813
      %v1848 = vpack.c.b16 %v1816, %v1814
      %1881 = vmatpush.bf16.msra.mxu0 %v1552
      %1882 = vmatpush.bf16.msra.mxu0 %v1551
      %1883 = vmatpush.bf16.msra.mxu0 %v1550
      %1884 = vmatpush.bf16.msra.mxu0 %v1549
      %1885 = vmatpush.bf16.msra.mxu0 %v1548
      %1886 = vmatpush.bf16.msra.mxu0 %v1547
      %1887 = vmatpush.bf16.msra.mxu0 %v1546
      %1888 = vmatpush.bf16.msra.mxu0 %v1545
      %1889 = vmatmul.bf16.gmra.mxu0 %v1817
      %v1890 = vpop.f32.mrf.mxu0
      %v1891 = vadd.f32 %v1564, %v1890
      %v1892 = vpop.f32.mrf.mxu0
      %v1893 = vadd.f32 %v1569, %v1892
      %1894 = vmatmul.bf16.gmra.mxu0 %v1819
      %v1895 = vpop.f32.mrf.mxu0
      %v1896 = vadd.f32 %v1574, %v1895
      %v1897 = vpop.f32.mrf.mxu0
      %v1898 = vadd.f32 %v1579, %v1897
      %1899 = vmatmul.bf16.gmra.mxu0 %v1821
      %v1900 = vpop.f32.mrf.mxu0
      %v1901 = vadd.f32 %v1584, %v1900
      %v1902 = vpop.f32.mrf.mxu0
      %v1903 = vadd.f32 %v1589, %v1902
      %1904 = vmatmul.bf16.gmra.mxu0 %v1823
      %v1905 = vpop.f32.mrf.mxu0
      %v1906 = vadd.f32 %v1594, %v1905
      %v1907 = vpop.f32.mrf.mxu0
      %v1908 = vadd.f32 %v1599, %v1907
      %1909 = vmatmul.bf16.gmra.mxu0 %v1825
      %v1910 = vpop.f32.mrf.mxu0
      %v1911 = vadd.f32 %v1604, %v1910
      %v1912 = vpop.f32.mrf.mxu0
      %v1913 = vadd.f32 %v1609, %v1912
      %1914 = vmatmul.bf16.gmra.mxu0 %v1827
      %v1915 = vpop.f32.mrf.mxu0
      %v1916 = vadd.f32 %v1614, %v1915
      %v1917 = vpop.f32.mrf.mxu0
      %v1918 = vadd.f32 %v1619, %v1917
      %1919 = vmatmul.bf16.gmra.mxu0 %v1829
      %v1920 = vpop.f32.mrf.mxu0
      %v1921 = vadd.f32 %v1624, %v1920
      %v1922 = vpop.f32.mrf.mxu0
      %v1923 = vadd.f32 %v1629, %v1922
      %1924 = vmatmul.bf16.gmra.mxu0 %v1831
      %v1925 = vpop.f32.mrf.mxu0
      %v1926 = vadd.f32 %v1634, %v1925
      %v1927 = vpop.f32.mrf.mxu0
      %v1928 = vadd.f32 %v1639, %v1927
      %1929 = vmatmul.bf16.gmra.mxu0 %v1833
      %v1930 = vpop.f32.mrf.mxu0
      %v1931 = vadd.f32 %v1644, %v1930
      %v1932 = vpop.f32.mrf.mxu0
      %v1933 = vadd.f32 %v1649, %v1932
      %1934 = vmatmul.bf16.gmra.mxu0 %v1835
      %v1935 = vpop.f32.mrf.mxu0
      %v1936 = vadd.f32 %v1654, %v1935
      %v1937 = vpop.f32.mrf.mxu0
      %v1938 = vadd.f32 %v1659, %v1937
      %1939 = vmatmul.bf16.gmra.mxu0 %v1837
      %v1940 = vpop.f32.mrf.mxu0
      %v1941 = vadd.f32 %v1664, %v1940
      %v1942 = vpop.f32.mrf.mxu0
      %v1943 = vadd.f32 %v1669, %v1942
      %1944 = vmatmul.bf16.gmra.mxu0 %v1839
      %v1945 = vpop.f32.mrf.mxu0
      %v1946 = vadd.f32 %v1674, %v1945
      %v1947 = vpop.f32.mrf.mxu0
      %v1948 = vadd.f32 %v1679, %v1947
      %1949 = vmatmul.bf16.gmra.mxu0 %v1841
      %v1950 = vpop.f32.mrf.mxu0
      %v1951 = vadd.f32 %v1684, %v1950
      %v1952 = vpop.f32.mrf.mxu0
      %v1953 = vadd.f32 %v1689, %v1952
      %1954 = vmatmul.bf16.gmra.mxu0 %v1843
      %v1955 = vpop.f32.mrf.mxu0
      %v1956 = vadd.f32 %v1694, %v1955
      %v1957 = vpop.f32.mrf.mxu0
      %v1958 = vadd.f32 %v1699, %v1957
      %1959 = vmatmul.bf16.gmra.mxu0 %v1845
      %v1960 = vpop.f32.mrf.mxu0
      %v1961 = vadd.f32 %v1704, %v1960
      %v1962 = vpop.f32.mrf.mxu0
      %v1963 = vadd.f32 %v1709, %v1962
      %1964 = vmatmul.bf16.gmra.mxu0 %v1847
      %v1965 = vpop.f32.mrf.mxu0
      %v1966 = vadd.f32 %v1714, %v1965
      %v1967 = vpop.f32.mrf.mxu0
      %v1968 = vadd.f32 %v1719, %v1967
      %1969 = vdwg.mxu0
      %1970 = vmatpush.bf16.msra.mxu0 %v1560
      %1971 = vmatpush.bf16.msra.mxu0 %v1559
      %1972 = vmatpush.bf16.msra.mxu0 %v1558
      %1973 = vmatpush.bf16.msra.mxu0 %v1557
      %1974 = vmatpush.bf16.msra.mxu0 %v1556
      %1975 = vmatpush.bf16.msra.mxu0 %v1555
      %1976 = vmatpush.bf16.msra.mxu0 %v1554
      %1977 = vmatpush.bf16.msra.mxu0 %v1553
      %1978 = vmatmul.bf16.gmra.mxu0 %v1818
      %v1979 = vpop.f32.mrf.mxu0
      %v1980 = vadd.f32 %v1891, %v1979
      %v1981 = vpop.f32.mrf.mxu0
      %v1982 = vadd.f32 %v1893, %v1981
      %1983 = vmatmul.bf16.gmra.mxu0 %v1820
      %v1984 = vpop.f32.mrf.mxu0
      %v1985 = vadd.f32 %v1896, %v1984
      %v1986 = vpop.f32.mrf.mxu0
      %v1987 = vadd.f32 %v1898, %v1986
      %1988 = vmatmul.bf16.gmra.mxu0 %v1822
      %v1989 = vpop.f32.mrf.mxu0
      %v1990 = vadd.f32 %v1901, %v1989
      %v1991 = vpop.f32.mrf.mxu0
      %v1992 = vadd.f32 %v1903, %v1991
      %1993 = vmatmul.bf16.gmra.mxu0 %v1824
      %v1994 = vpop.f32.mrf.mxu0
      %v1995 = vadd.f32 %v1906, %v1994
      %v1996 = vpop.f32.mrf.mxu0
      %v1997 = vadd.f32 %v1908, %v1996
      %1998 = vmatmul.bf16.gmra.mxu0 %v1826
      %v1999 = vpop.f32.mrf.mxu0
      %v2000 = vadd.f32 %v1911, %v1999
      %v2001 = vpop.f32.mrf.mxu0
      %v2002 = vadd.f32 %v1913, %v2001
      %2003 = vmatmul.bf16.gmra.mxu0 %v1828
      %v2004 = vpop.f32.mrf.mxu0
      %v2005 = vadd.f32 %v1916, %v2004
      %v2006 = vpop.f32.mrf.mxu0
      %v2007 = vadd.f32 %v1918, %v2006
      %2008 = vmatmul.bf16.gmra.mxu0 %v1830
      %v2009 = vpop.f32.mrf.mxu0
      %v2010 = vadd.f32 %v1921, %v2009
      %v2011 = vpop.f32.mrf.mxu0
      %v2012 = vadd.f32 %v1923, %v2011
      %2013 = vmatmul.bf16.gmra.mxu0 %v1832
      %v2014 = vpop.f32.mrf.mxu0
      %v2015 = vadd.f32 %v1926, %v2014
      %v2016 = vpop.f32.mrf.mxu0
      %v2017 = vadd.f32 %v1928, %v2016
      %2018 = vmatmul.bf16.gmra.mxu0 %v1834
      %v2019 = vpop.f32.mrf.mxu0
      %v2020 = vadd.f32 %v1931, %v2019
      %v2021 = vpop.f32.mrf.mxu0
      %v2022 = vadd.f32 %v1933, %v2021
      %2023 = vmatmul.bf16.gmra.mxu0 %v1836
      %v2024 = vpop.f32.mrf.mxu0
      %v2025 = vadd.f32 %v1936, %v2024
      %v2026 = vpop.f32.mrf.mxu0
      %v2027 = vadd.f32 %v1938, %v2026
      %2028 = vmatmul.bf16.gmra.mxu0 %v1838
      %v2029 = vpop.f32.mrf.mxu0
      %v2030 = vadd.f32 %v1941, %v2029
      %v2031 = vpop.f32.mrf.mxu0
      %v2032 = vadd.f32 %v1943, %v2031
      %2033 = vmatmul.bf16.gmra.mxu0 %v1840
      %v2034 = vpop.f32.mrf.mxu0
      %v2035 = vadd.f32 %v1946, %v2034
      %v2036 = vpop.f32.mrf.mxu0
      %v2037 = vadd.f32 %v1948, %v2036
      %2038 = vmatmul.bf16.gmra.mxu0 %v1842
      %v2039 = vpop.f32.mrf.mxu0
      %v2040 = vadd.f32 %v1951, %v2039
      %v2041 = vpop.f32.mrf.mxu0
      %v2042 = vadd.f32 %v1953, %v2041
      %2043 = vmatmul.bf16.gmra.mxu0 %v1844
      %v2044 = vpop.f32.mrf.mxu0
      %v2045 = vadd.f32 %v1956, %v2044
      %v2046 = vpop.f32.mrf.mxu0
      %v2047 = vadd.f32 %v1958, %v2046
      %2048 = vmatmul.bf16.gmra.mxu0 %v1846
      %v2049 = vpop.f32.mrf.mxu0
      %v2050 = vadd.f32 %v1961, %v2049
      %v2051 = vpop.f32.mrf.mxu0
      %v2052 = vadd.f32 %v1963, %v2051
      %2053 = vmatmul.bf16.gmra.mxu0 %v1848
      %v2054 = vpop.f32.mrf.mxu0
      %v2055 = vadd.f32 %v1966, %v2054
      %v2056 = vpop.f32.mrf.mxu0
      %v2057 = vadd.f32 %v1968, %v2056
      %2058 = vdwg.mxu0
      %v2059 = vmax.f32 %v1980, 0.0
      %v2060 = vmax.f32 %v1982, 0.0
      %v2061 = vmax.f32 %v1985, 0.0
      %v2062 = vmax.f32 %v1987, 0.0
      %v2063 = vmax.f32 %v1990, 0.0
      %v2064 = vmax.f32 %v1992, 0.0
      %v2065 = vmax.f32 %v1995, 0.0
      %v2066 = vmax.f32 %v1997, 0.0
      %v2067 = vmax.f32 %v2000, 0.0
      %v2068 = vmax.f32 %v2002, 0.0
      %v2069 = vmax.f32 %v2005, 0.0
      %v2070 = vmax.f32 %v2007, 0.0
      %v2071 = vmax.f32 %v2010, 0.0
      %v2072 = vmax.f32 %v2012, 0.0
      %v2073 = vmax.f32 %v2015, 0.0
      %v2074 = vmax.f32 %v2017, 0.0
      %v2075 = vmax.f32 %v2020, 0.0
      %v2076 = vmax.f32 %v2022, 0.0
      %v2077 = vmax.f32 %v2025, 0.0
      %v2078 = vmax.f32 %v2027, 0.0
      %v2079 = vmax.f32 %v2030, 0.0
      %v2080 = vmax.f32 %v2032, 0.0
      %v2081 = vmax.f32 %v2035, 0.0
      %v2082 = vmax.f32 %v2037, 0.0
      %v2083 = vmax.f32 %v2040, 0.0
      %v2084 = vmax.f32 %v2042, 0.0
      %v2085 = vmax.f32 %v2045, 0.0
      %v2086 = vmax.f32 %v2047, 0.0
      %v2087 = vmax.f32 %v2050, 0.0
      %v2088 = vmax.f32 %v2052, 0.0
      %v2089 = vmax.f32 %v2055, 0.0
      %v2090 = vmax.f32 %v2057, 0.0
      %v2091 = vld [vmem:[%s5] sm:$0xff]
      %v2092 = vld [vmem:[%s5 + $0x8] sm:$0xff]
      %v2093 = vld [vmem:[%s5 + $0x10] sm:$0xff]
      %v2094 = vld [vmem:[%s5 + $0x18] sm:$0xff]
      %v2095 = vld [vmem:[%s5 + $0x20] sm:$0xff]
      %v2096 = vld [vmem:[%s5 + $0x28] sm:$0xff]
      %v2097 = vld [vmem:[%s5 + $0x30] sm:$0xff]
      %v2098 = vld [vmem:[%s5 + $0x38] sm:$0xff]
      %v2099 = vld [vmem:[%s5 + $0x40] sm:$0xff]
      %v2100 = vld [vmem:[%s5 + $0x48] sm:$0xff]
      %v2101 = vld [vmem:[%s5 + $0x50] sm:$0xff]
      %v2102 = vld [vmem:[%s5 + $0x58] sm:$0xff]
      %v2103 = vld [vmem:[%s5 + $0x60] sm:$0xff]
      %v2104 = vld [vmem:[%s5 + $0x68] sm:$0xff]
      %v2105 = vld [vmem:[%s5 + $0x70] sm:$0xff]
      %v2106 = vld [vmem:[%s5 + $0x78] sm:$0xff]
      %v2107 = vld [vmem:[%s5 + $0x80] sm:$0xff]
      %v2108 = vld [vmem:[%s5 + $0x88] sm:$0xff]
      %v2109 = vld [vmem:[%s5 + $0x90] sm:$0xff]
      %v2110 = vld [vmem:[%s5 + $0x98] sm:$0xff]
      %v2111 = vld [vmem:[%s5 + $0xa0] sm:$0xff]
      %v2112 = vld [vmem:[%s5 + $0xa8] sm:$0xff]
      %v2113 = vld [vmem:[%s5 + $0xb0] sm:$0xff]
      %v2114 = vld [vmem:[%s5 + $0xb8] sm:$0xff]
      %v2115 = vld [vmem:[%s5 + $0xc0] sm:$0xff]
      %v2116 = vld [vmem:[%s5 + $0xc8] sm:$0xff]
      %v2117 = vld [vmem:[%s5 + $0xd0] sm:$0xff]
      %v2118 = vld [vmem:[%s5 + $0xd8] sm:$0xff]
      %v2119 = vld [vmem:[%s5 + $0xe0] sm:$0xff]
      %v2120 = vld [vmem:[%s5 + $0xe8] sm:$0xff]
      %v2121 = vld [vmem:[%s5 + $0xf0] sm:$0xff]
      %v2122 = vld [vmem:[%s5 + $0xf8] sm:$0xff]
      %v2123 = vld [vmem:[%s6] sm:$0xff]
      %v2124 = vld [vmem:[%s6 + $0x8] sm:$0xff]
      %v2125 = vld [vmem:[%s6 + $0x10] sm:$0xff]
      %v2126 = vld [vmem:[%s6 + $0x18] sm:$0xff]
      %v2127 = vld [vmem:[%s6 + $0x20] sm:$0xff]
      %v2128 = vld [vmem:[%s6 + $0x28] sm:$0xff]
      %v2129 = vld [vmem:[%s6 + $0x30] sm:$0xff]
      %v2130 = vld [vmem:[%s6 + $0x38] sm:$0xff]
      %v2131 = vld [vmem:[%s6 + $0x40] sm:$0xff]
      %v2132 = vld [vmem:[%s6 + $0x48] sm:$0xff]
      %v2133 = vld [vmem:[%s6 + $0x50] sm:$0xff]
      %v2134 = vld [vmem:[%s6 + $0x58] sm:$0xff]
      %v2135 = vld [vmem:[%s6 + $0x60] sm:$0xff]
      %v2136 = vld [vmem:[%s6 + $0x68] sm:$0xff]
      %v2137 = vld [vmem:[%s6 + $0x70] sm:$0xff]
      %v2138 = vld [vmem:[%s6 + $0x78] sm:$0xff]
      %v2139 = vld [vmem:[%s6 + $0x80] sm:$0xff]
      %v2140 = vld [vmem:[%s6 + $0x88] sm:$0xff]
      %v2141 = vld [vmem:[%s6 + $0x90] sm:$0xff]
      %v2142 = vld [vmem:[%s6 + $0x98] sm:$0xff]
      %v2143 = vld [vmem:[%s6 + $0xa0] sm:$0xff]
      %v2144 = vld [vmem:[%s6 + $0xa8] sm:$0xff]
      %v2145 = vld [vmem:[%s6 + $0xb0] sm:$0xff]
      %v2146 = vld [vmem:[%s6 + $0xb8] sm:$0xff]
      %v2147 = vld [vmem:[%s6 + $0xc0] sm:$0xff]
      %v2148 = vld [vmem:[%s6 + $0xc8] sm:$0xff]
      %v2149 = vld [vmem:[%s6 + $0xd0] sm:$0xff]
      %v2150 = vld [vmem:[%s6 + $0xd8] sm:$0xff]
      %v2151 = vld [vmem:[%s6 + $0xe0] sm:$0xff]
      %v2152 = vld [vmem:[%s6 + $0xe8] sm:$0xff]
      %v2153 = vld [vmem:[%s6 + $0xf0] sm:$0xff]
      %v2154 = vld [vmem:[%s6 + $0xf8] sm:$0xff]
      %v2155 = vpack.c.bf16 %v2060, %v2059
      %v2156 = vpack.c.bf16 %v2062, %v2061
      %v2157 = vpack.c.bf16 %v2064, %v2063
      %v2158 = vpack.c.bf16 %v2066, %v2065
      %v2159 = vpack.c.bf16 %v2068, %v2067
      %v2160 = vpack.c.bf16 %v2070, %v2069
      %v2161 = vpack.c.bf16 %v2072, %v2071
      %v2162 = vpack.c.bf16 %v2074, %v2073
      %v2163 = vpack.c.bf16 %v2076, %v2075
      %v2164 = vpack.c.bf16 %v2078, %v2077
      %v2165 = vpack.c.bf16 %v2080, %v2079
      %v2166 = vpack.c.bf16 %v2082, %v2081
      %v2167 = vpack.c.bf16 %v2084, %v2083
      %v2168 = vpack.c.bf16 %v2086, %v2085
      %v2169 = vpack.c.bf16 %v2088, %v2087
      %v2170 = vpack.c.bf16 %v2090, %v2089
      %2172 = vset.pattern.permute.xlu0 0
      %2173 = vperm.xlu0 %2172, %v2123
      %v2174 = vpop.permute.xlu0 %2173
      %2177 = vset.pattern.permute.xlu0 0
      %2178 = vperm.xlu0 %2177, %v2124
      %v2179 = vpop.permute.xlu0 %2178
      %2182 = vset.pattern.permute.xlu0 0
      %2183 = vperm.xlu0 %2182, %v2125
      %v2184 = vpop.permute.xlu0 %2183
      %2187 = vset.pattern.permute.xlu0 0
      %2188 = vperm.xlu0 %2187, %v2126
      %v2189 = vpop.permute.xlu0 %2188
      %2192 = vset.pattern.permute.xlu0 0
      %2193 = vperm.xlu0 %2192, %v2127
      %v2194 = vpop.permute.xlu0 %2193
      %2197 = vset.pattern.permute.xlu0 0
      %2198 = vperm.xlu0 %2197, %v2128
      %v2199 = vpop.permute.xlu0 %2198
      %2202 = vset.pattern.permute.xlu0 0
      %2203 = vperm.xlu0 %2202, %v2129
      %v2204 = vpop.permute.xlu0 %2203
      %2207 = vset.pattern.permute.xlu0 0
      %2208 = vperm.xlu0 %2207, %v2130
      %v2209 = vpop.permute.xlu0 %2208
      %2212 = vset.pattern.permute.xlu0 0
      %2213 = vperm.xlu0 %2212, %v2131
      %v2214 = vpop.permute.xlu0 %2213
      %2217 = vset.pattern.permute.xlu0 0
      %2218 = vperm.xlu0 %2217, %v2132
      %v2219 = vpop.permute.xlu0 %2218
      %2222 = vset.pattern.permute.xlu0 0
      %2223 = vperm.xlu0 %2222, %v2133
      %v2224 = vpop.permute.xlu0 %2223
      %2227 = vset.pattern.permute.xlu0 0
      %2228 = vperm.xlu0 %2227, %v2134
      %v2229 = vpop.permute.xlu0 %2228
      %2232 = vset.pattern.permute.xlu0 0
      %2233 = vperm.xlu0 %2232, %v2135
      %v2234 = vpop.permute.xlu0 %2233
      %2237 = vset.pattern.permute.xlu0 0
      %2238 = vperm.xlu0 %2237, %v2136
      %v2239 = vpop.permute.xlu0 %2238
      %2242 = vset.pattern.permute.xlu0 0
      %2243 = vperm.xlu0 %2242, %v2137
      %v2244 = vpop.permute.xlu0 %2243
      %2247 = vset.pattern.permute.xlu0 0
      %2248 = vperm.xlu0 %2247, %v2138
      %v2249 = vpop.permute.xlu0 %2248
      %2252 = vset.pattern.permute.xlu0 0
      %2253 = vperm.xlu0 %2252, %v2139
      %v2254 = vpop.permute.xlu0 %2253
      %2257 = vset.pattern.permute.xlu0 0
      %2258 = vperm.xlu0 %2257, %v2140
      %v2259 = vpop.permute.xlu0 %2258
      %2262 = vset.pattern.permute.xlu0 0
      %2263 = vperm.xlu0 %2262, %v2141
      %v2264 = vpop.permute.xlu0 %2263
      %2267 = vset.pattern.permute.xlu0 0
      %2268 = vperm.xlu0 %2267, %v2142
      %v2269 = vpop.permute.xlu0 %2268
      %2272 = vset.pattern.permute.xlu0 0
      %2273 = vperm.xlu0 %2272, %v2143
      %v2274 = vpop.permute.xlu0 %2273
      %2277 = vset.pattern.permute.xlu0 0
      %2278 = vperm.xlu0 %2277, %v2144
      %v2279 = vpop.permute.xlu0 %2278
      %2282 = vset.pattern.permute.xlu0 0
      %2283 = vperm.xlu0 %2282, %v2145
      %v2284 = vpop.permute.xlu0 %2283
      %2287 = vset.pattern.permute.xlu0 0
      %2288 = vperm.xlu0 %2287, %v2146
      %v2289 = vpop.permute.xlu0 %2288
      %2292 = vset.pattern.permute.xlu0 0
      %2293 = vperm.xlu0 %2292, %v2147
      %v2294 = vpop.permute.xlu0 %2293
      %2297 = vset.pattern.permute.xlu0 0
      %2298 = vperm.xlu0 %2297, %v2148
      %v2299 = vpop.permute.xlu0 %2298
      %2302 = vset.pattern.permute.xlu0 0
      %2303 = vperm.xlu0 %2302, %v2149
      %v2304 = vpop.permute.xlu0 %2303
      %2307 = vset.pattern.permute.xlu0 0
      %2308 = vperm.xlu0 %2307, %v2150
      %v2309 = vpop.permute.xlu0 %2308
      %2312 = vset.pattern.permute.xlu0 0
      %2313 = vperm.xlu0 %2312, %v2151
      %v2314 = vpop.permute.xlu0 %2313
      %2317 = vset.pattern.permute.xlu0 0
      %2318 = vperm.xlu0 %2317, %v2152
      %v2319 = vpop.permute.xlu0 %2318
      %2322 = vset.pattern.permute.xlu0 0
      %2323 = vperm.xlu0 %2322, %v2153
      %v2324 = vpop.permute.xlu0 %2323
      %2327 = vset.pattern.permute.xlu0 0
      %2328 = vperm.xlu0 %2327, %v2154
      %v2329 = vpop.permute.xlu0 %2328
      %v2363 = vunpack.c.l.b16 %v2091
      %v2364 = vunpack.c.h.b16 %v2091
      %v2365 = vunpack.c.l.b16 %v2092
      %v2366 = vunpack.c.h.b16 %v2092
      %v2367 = vunpack.c.l.b16 %v2093
      %v2368 = vunpack.c.h.b16 %v2093
      %v2369 = vunpack.c.l.b16 %v2094
      %v2370 = vunpack.c.h.b16 %v2094
      %v2371 = vunpack.c.l.b16 %v2095
      %v2372 = vunpack.c.h.b16 %v2095
      %v2373 = vunpack.c.l.b16 %v2096
      %v2374 = vunpack.c.h.b16 %v2096
      %v2375 = vunpack.c.l.b16 %v2097
      %v2376 = vunpack.c.h.b16 %v2097
      %v2377 = vunpack.c.l.b16 %v2098
      %v2378 = vunpack.c.h.b16 %v2098
      %v2379 = vunpack.c.l.b16 %v2099
      %v2380 = vunpack.c.h.b16 %v2099
      %v2381 = vunpack.c.l.b16 %v2100
      %v2382 = vunpack.c.h.b16 %v2100
      %v2383 = vunpack.c.l.b16 %v2101
      %v2384 = vunpack.c.h.b16 %v2101
      %v2385 = vunpack.c.l.b16 %v2102
      %v2386 = vunpack.c.h.b16 %v2102
      %v2387 = vunpack.c.l.b16 %v2103
      %v2388 = vunpack.c.h.b16 %v2103
      %v2389 = vunpack.c.l.b16 %v2104
      %v2390 = vunpack.c.h.b16 %v2104
      %v2391 = vunpack.c.l.b16 %v2105
      %v2392 = vunpack.c.h.b16 %v2105
      %v2393 = vunpack.c.l.b16 %v2106
      %v2394 = vunpack.c.h.b16 %v2106
      %v2395 = vunpack.c.l.b16 %v2107
      %v2396 = vunpack.c.h.b16 %v2107
      %v2397 = vunpack.c.l.b16 %v2108
      %v2398 = vunpack.c.h.b16 %v2108
      %v2399 = vunpack.c.l.b16 %v2109
      %v2400 = vunpack.c.h.b16 %v2109
      %v2401 = vunpack.c.l.b16 %v2110
      %v2402 = vunpack.c.h.b16 %v2110
      %v2403 = vunpack.c.l.b16 %v2111
      %v2404 = vunpack.c.h.b16 %v2111
      %v2405 = vunpack.c.l.b16 %v2112
      %v2406 = vunpack.c.h.b16 %v2112
      %v2407 = vunpack.c.l.b16 %v2113
      %v2408 = vunpack.c.h.b16 %v2113
      %v2409 = vunpack.c.l.b16 %v2114
      %v2410 = vunpack.c.h.b16 %v2114
      %v2411 = vunpack.c.l.b16 %v2115
      %v2412 = vunpack.c.h.b16 %v2115
      %v2413 = vunpack.c.l.b16 %v2116
      %v2414 = vunpack.c.h.b16 %v2116
      %v2415 = vunpack.c.l.b16 %v2117
      %v2416 = vunpack.c.h.b16 %v2117
      %v2417 = vunpack.c.l.b16 %v2118
      %v2418 = vunpack.c.h.b16 %v2118
      %v2419 = vunpack.c.l.b16 %v2119
      %v2420 = vunpack.c.h.b16 %v2119
      %v2421 = vunpack.c.l.b16 %v2120
      %v2422 = vunpack.c.h.b16 %v2120
      %v2423 = vunpack.c.l.b16 %v2121
      %v2424 = vunpack.c.h.b16 %v2121
      %v2425 = vunpack.c.l.b16 %v2122
      %v2426 = vunpack.c.h.b16 %v2122
      %v2427 = vpack.c.b16 %v2365, %v2363
      %v2428 = vpack.c.b16 %v2366, %v2364
      %v2429 = vpack.c.b16 %v2369, %v2367
      %v2430 = vpack.c.b16 %v2370, %v2368
      %v2431 = vpack.c.b16 %v2373, %v2371
      %v2432 = vpack.c.b16 %v2374, %v2372
      %v2433 = vpack.c.b16 %v2377, %v2375
      %v2434 = vpack.c.b16 %v2378, %v2376
      %v2435 = vpack.c.b16 %v2381, %v2379
      %v2436 = vpack.c.b16 %v2382, %v2380
      %v2437 = vpack.c.b16 %v2385, %v2383
      %v2438 = vpack.c.b16 %v2386, %v2384
      %v2439 = vpack.c.b16 %v2389, %v2387
      %v2440 = vpack.c.b16 %v2390, %v2388
      %v2441 = vpack.c.b16 %v2393, %v2391
      %v2442 = vpack.c.b16 %v2394, %v2392
      %v2443 = vpack.c.b16 %v2397, %v2395
      %v2444 = vpack.c.b16 %v2398, %v2396
      %v2445 = vpack.c.b16 %v2401, %v2399
      %v2446 = vpack.c.b16 %v2402, %v2400
      %v2447 = vpack.c.b16 %v2405, %v2403
      %v2448 = vpack.c.b16 %v2406, %v2404
      %v2449 = vpack.c.b16 %v2409, %v2407
      %v2450 = vpack.c.b16 %v2410, %v2408
      %v2451 = vpack.c.b16 %v2413, %v2411
      %v2452 = vpack.c.b16 %v2414, %v2412
      %v2453 = vpack.c.b16 %v2417, %v2415
      %v2454 = vpack.c.b16 %v2418, %v2416
      %v2455 = vpack.c.b16 %v2421, %v2419
      %v2456 = vpack.c.b16 %v2422, %v2420
      %v2457 = vpack.c.b16 %v2425, %v2423
      %v2458 = vpack.c.b16 %v2426, %v2424
      %2491 = vmatpush.bf16.msra.mxu0 %v2162
      %2492 = vmatpush.bf16.msra.mxu0 %v2161
      %2493 = vmatpush.bf16.msra.mxu0 %v2160
      %2494 = vmatpush.bf16.msra.mxu0 %v2159
      %2495 = vmatpush.bf16.msra.mxu0 %v2158
      %2496 = vmatpush.bf16.msra.mxu0 %v2157
      %2497 = vmatpush.bf16.msra.mxu0 %v2156
      %2498 = vmatpush.bf16.msra.mxu0 %v2155
      %2499 = vmatmul.bf16.gmra.mxu0 %v2427
      %v2500 = vpop.f32.mrf.mxu0
      %v2501 = vadd.f32 %v2174, %v2500
      %v2502 = vpop.f32.mrf.mxu0
      %v2503 = vadd.f32 %v2179, %v2502
      %2504 = vmatmul.bf16.gmra.mxu0 %v2429
      %v2505 = vpop.f32.mrf.mxu0
      %v2506 = vadd.f32 %v2184, %v2505
      %v2507 = vpop.f32.mrf.mxu0
      %v2508 = vadd.f32 %v2189, %v2507
      %2509 = vmatmul.bf16.gmra.mxu0 %v2431
      %v2510 = vpop.f32.mrf.mxu0
      %v2511 = vadd.f32 %v2194, %v2510
      %v2512 = vpop.f32.mrf.mxu0
      %v2513 = vadd.f32 %v2199, %v2512
      %2514 = vmatmul.bf16.gmra.mxu0 %v2433
      %v2515 = vpop.f32.mrf.mxu0
      %v2516 = vadd.f32 %v2204, %v2515
      %v2517 = vpop.f32.mrf.mxu0
      %v2518 = vadd.f32 %v2209, %v2517
      %2519 = vmatmul.bf16.gmra.mxu0 %v2435
      %v2520 = vpop.f32.mrf.mxu0
      %v2521 = vadd.f32 %v2214, %v2520
      %v2522 = vpop.f32.mrf.mxu0
      %v2523 = vadd.f32 %v2219, %v2522
      %2524 = vmatmul.bf16.gmra.mxu0 %v2437
      %v2525 = vpop.f32.mrf.mxu0
      %v2526 = vadd.f32 %v2224, %v2525
      %v2527 = vpop.f32.mrf.mxu0
      %v2528 = vadd.f32 %v2229, %v2527
      %2529 = vmatmul.bf16.gmra.mxu0 %v2439
      %v2530 = vpop.f32.mrf.mxu0
      %v2531 = vadd.f32 %v2234, %v2530
      %v2532 = vpop.f32.mrf.mxu0
      %v2533 = vadd.f32 %v2239, %v2532
      %2534 = vmatmul.bf16.gmra.mxu0 %v2441
      %v2535 = vpop.f32.mrf.mxu0
      %v2536 = vadd.f32 %v2244, %v2535
      %v2537 = vpop.f32.mrf.mxu0
      %v2538 = vadd.f32 %v2249, %v2537
      %2539 = vmatmul.bf16.gmra.mxu0 %v2443
      %v2540 = vpop.f32.mrf.mxu0
      %v2541 = vadd.f32 %v2254, %v2540
      %v2542 = vpop.f32.mrf.mxu0
      %v2543 = vadd.f32 %v2259, %v2542
      %2544 = vmatmul.bf16.gmra.mxu0 %v2445
      %v2545 = vpop.f32.mrf.mxu0
      %v2546 = vadd.f32 %v2264, %v2545
      %v2547 = vpop.f32.mrf.mxu0
      %v2548 = vadd.f32 %v2269, %v2547
      %2549 = vmatmul.bf16.gmra.mxu0 %v2447
      %v2550 = vpop.f32.mrf.mxu0
      %v2551 = vadd.f32 %v2274, %v2550
      %v2552 = vpop.f32.mrf.mxu0
      %v2553 = vadd.f32 %v2279, %v2552
      %2554 = vmatmul.bf16.gmra.mxu0 %v2449
      %v2555 = vpop.f32.mrf.mxu0
      %v2556 = vadd.f32 %v2284, %v2555
      %v2557 = vpop.f32.mrf.mxu0
      %v2558 = vadd.f32 %v2289, %v2557
      %2559 = vmatmul.bf16.gmra.mxu0 %v2451
      %v2560 = vpop.f32.mrf.mxu0
      %v2561 = vadd.f32 %v2294, %v2560
      %v2562 = vpop.f32.mrf.mxu0
      %v2563 = vadd.f32 %v2299, %v2562
      %2564 = vmatmul.bf16.gmra.mxu0 %v2453
      %v2565 = vpop.f32.mrf.mxu0
      %v2566 = vadd.f32 %v2304, %v2565
      %v2567 = vpop.f32.mrf.mxu0
      %v2568 = vadd.f32 %v2309, %v2567
      %2569 = vmatmul.bf16.gmra.mxu0 %v2455
      %v2570 = vpop.f32.mrf.mxu0
      %v2571 = vadd.f32 %v2314, %v2570
      %v2572 = vpop.f32.mrf.mxu0
      %v2573 = vadd.f32 %v2319, %v2572
      %2574 = vmatmul.bf16.gmra.mxu0 %v2457
      %v2575 = vpop.f32.mrf.mxu0
      %v2576 = vadd.f32 %v2324, %v2575
      %v2577 = vpop.f32.mrf.mxu0
      %v2578 = vadd.f32 %v2329, %v2577
      %2579 = vdwg.mxu0
      %2580 = vmatpush.bf16.msra.mxu0 %v2170
      %2581 = vmatpush.bf16.msra.mxu0 %v2169
      %2582 = vmatpush.bf16.msra.mxu0 %v2168
      %2583 = vmatpush.bf16.msra.mxu0 %v2167
      %2584 = vmatpush.bf16.msra.mxu0 %v2166
      %2585 = vmatpush.bf16.msra.mxu0 %v2165
      %2586 = vmatpush.bf16.msra.mxu0 %v2164
      %2587 = vmatpush.bf16.msra.mxu0 %v2163
      %2588 = vmatmul.bf16.gmra.mxu0 %v2428
      %v2589 = vpop.f32.mrf.mxu0
      %v2590 = vadd.f32 %v2501, %v2589
      %v2591 = vpop.f32.mrf.mxu0
      %v2592 = vadd.f32 %v2503, %v2591
      %2593 = vmatmul.bf16.gmra.mxu0 %v2430
      %v2594 = vpop.f32.mrf.mxu0
      %v2595 = vadd.f32 %v2506, %v2594
      %v2596 = vpop.f32.mrf.mxu0
      %v2597 = vadd.f32 %v2508, %v2596
      %2598 = vmatmul.bf16.gmra.mxu0 %v2432
      %v2599 = vpop.f32.mrf.mxu0
      %v2600 = vadd.f32 %v2511, %v2599
      %v2601 = vpop.f32.mrf.mxu0
      %v2602 = vadd.f32 %v2513, %v2601
      %2603 = vmatmul.bf16.gmra.mxu0 %v2434
      %v2604 = vpop.f32.mrf.mxu0
      %v2605 = vadd.f32 %v2516, %v2604
      %v2606 = vpop.f32.mrf.mxu0
      %v2607 = vadd.f32 %v2518, %v2606
      %2608 = vmatmul.bf16.gmra.mxu0 %v2436
      %v2609 = vpop.f32.mrf.mxu0
      %v2610 = vadd.f32 %v2521, %v2609
      %v2611 = vpop.f32.mrf.mxu0
      %v2612 = vadd.f32 %v2523, %v2611
      %2613 = vmatmul.bf16.gmra.mxu0 %v2438
      %v2614 = vpop.f32.mrf.mxu0
      %v2615 = vadd.f32 %v2526, %v2614
      %v2616 = vpop.f32.mrf.mxu0
      %v2617 = vadd.f32 %v2528, %v2616
      %2618 = vmatmul.bf16.gmra.mxu0 %v2440
      %v2619 = vpop.f32.mrf.mxu0
      %v2620 = vadd.f32 %v2531, %v2619
      %v2621 = vpop.f32.mrf.mxu0
      %v2622 = vadd.f32 %v2533, %v2621
      %2623 = vmatmul.bf16.gmra.mxu0 %v2442
      %v2624 = vpop.f32.mrf.mxu0
      %v2625 = vadd.f32 %v2536, %v2624
      %v2626 = vpop.f32.mrf.mxu0
      %v2627 = vadd.f32 %v2538, %v2626
      %2628 = vmatmul.bf16.gmra.mxu0 %v2444
      %v2629 = vpop.f32.mrf.mxu0
      %v2630 = vadd.f32 %v2541, %v2629
      %v2631 = vpop.f32.mrf.mxu0
      %v2632 = vadd.f32 %v2543, %v2631
      %2633 = vmatmul.bf16.gmra.mxu0 %v2446
      %v2634 = vpop.f32.mrf.mxu0
      %v2635 = vadd.f32 %v2546, %v2634
      %v2636 = vpop.f32.mrf.mxu0
      %v2637 = vadd.f32 %v2548, %v2636
      %2638 = vmatmul.bf16.gmra.mxu0 %v2448
      %v2639 = vpop.f32.mrf.mxu0
      %v2640 = vadd.f32 %v2551, %v2639
      %v2641 = vpop.f32.mrf.mxu0
      %v2642 = vadd.f32 %v2553, %v2641
      %2643 = vmatmul.bf16.gmra.mxu0 %v2450
      %v2644 = vpop.f32.mrf.mxu0
      %v2645 = vadd.f32 %v2556, %v2644
      %v2646 = vpop.f32.mrf.mxu0
      %v2647 = vadd.f32 %v2558, %v2646
      %2648 = vmatmul.bf16.gmra.mxu0 %v2452
      %v2649 = vpop.f32.mrf.mxu0
      %v2650 = vadd.f32 %v2561, %v2649
      %v2651 = vpop.f32.mrf.mxu0
      %v2652 = vadd.f32 %v2563, %v2651
      %2653 = vmatmul.bf16.gmra.mxu0 %v2454
      %v2654 = vpop.f32.mrf.mxu0
      %v2655 = vadd.f32 %v2566, %v2654
      %v2656 = vpop.f32.mrf.mxu0
      %v2657 = vadd.f32 %v2568, %v2656
      %2658 = vmatmul.bf16.gmra.mxu0 %v2456
      %v2659 = vpop.f32.mrf.mxu0
      %v2660 = vadd.f32 %v2571, %v2659
      %v2661 = vpop.f32.mrf.mxu0
      %v2662 = vadd.f32 %v2573, %v2661
      %2663 = vmatmul.bf16.gmra.mxu0 %v2458
      %v2664 = vpop.f32.mrf.mxu0
      %v2665 = vadd.f32 %v2576, %v2664
      %v2666 = vpop.f32.mrf.mxu0
      %v2667 = vadd.f32 %v2578, %v2666
      %2668 = vdwg.mxu0
      %v2669 = vmax.f32 %v2590, 0.0
      %v2670 = vmax.f32 %v2592, 0.0
      %v2671 = vmax.f32 %v2595, 0.0
      %v2672 = vmax.f32 %v2597, 0.0
      %v2673 = vmax.f32 %v2600, 0.0
      %v2674 = vmax.f32 %v2602, 0.0
      %v2675 = vmax.f32 %v2605, 0.0
      %v2676 = vmax.f32 %v2607, 0.0
      %v2677 = vmax.f32 %v2610, 0.0
      %v2678 = vmax.f32 %v2612, 0.0
      %v2679 = vmax.f32 %v2615, 0.0
      %v2680 = vmax.f32 %v2617, 0.0
      %v2681 = vmax.f32 %v2620, 0.0
      %v2682 = vmax.f32 %v2622, 0.0
      %v2683 = vmax.f32 %v2625, 0.0
      %v2684 = vmax.f32 %v2627, 0.0
      %v2685 = vmax.f32 %v2630, 0.0
      %v2686 = vmax.f32 %v2632, 0.0
      %v2687 = vmax.f32 %v2635, 0.0
      %v2688 = vmax.f32 %v2637, 0.0
      %v2689 = vmax.f32 %v2640, 0.0
      %v2690 = vmax.f32 %v2642, 0.0
      %v2691 = vmax.f32 %v2645, 0.0
      %v2692 = vmax.f32 %v2647, 0.0
      %v2693 = vmax.f32 %v2650, 0.0
      %v2694 = vmax.f32 %v2652, 0.0
      %v2695 = vmax.f32 %v2655, 0.0
      %v2696 = vmax.f32 %v2657, 0.0
      %v2697 = vmax.f32 %v2660, 0.0
      %v2698 = vmax.f32 %v2662, 0.0
      %v2699 = vmax.f32 %v2665, 0.0
      %v2700 = vmax.f32 %v2667, 0.0
      %v2701 = vld [vmem:[%s7] sm:$0xff]
      %v2702 = vld [vmem:[%s7 + $0x8] sm:$0xff]
      %v2703 = vld [vmem:[%s7 + $0x10] sm:$0xff]
      %v2704 = vld [vmem:[%s7 + $0x18] sm:$0xff]
      %v2705 = vld [vmem:[%s7 + $0x20] sm:$0xff]
      %v2706 = vld [vmem:[%s7 + $0x28] sm:$0xff]
      %v2707 = vld [vmem:[%s7 + $0x30] sm:$0xff]
      %v2708 = vld [vmem:[%s7 + $0x38] sm:$0xff]
      %v2709 = vld [vmem:[%s7 + $0x40] sm:$0xff]
      %v2710 = vld [vmem:[%s7 + $0x48] sm:$0xff]
      %v2711 = vld [vmem:[%s7 + $0x50] sm:$0xff]
      %v2712 = vld [vmem:[%s7 + $0x58] sm:$0xff]
      %v2713 = vld [vmem:[%s7 + $0x60] sm:$0xff]
      %v2714 = vld [vmem:[%s7 + $0x68] sm:$0xff]
      %v2715 = vld [vmem:[%s7 + $0x70] sm:$0xff]
      %v2716 = vld [vmem:[%s7 + $0x78] sm:$0xff]
      %v2717 = vld [vmem:[%s7 + $0x80] sm:$0xff]
      %v2718 = vld [vmem:[%s7 + $0x88] sm:$0xff]
      %v2719 = vld [vmem:[%s7 + $0x90] sm:$0xff]
      %v2720 = vld [vmem:[%s7 + $0x98] sm:$0xff]
      %v2721 = vld [vmem:[%s7 + $0xa0] sm:$0xff]
      %v2722 = vld [vmem:[%s7 + $0xa8] sm:$0xff]
      %v2723 = vld [vmem:[%s7 + $0xb0] sm:$0xff]
      %v2724 = vld [vmem:[%s7 + $0xb8] sm:$0xff]
      %v2725 = vld [vmem:[%s7 + $0xc0] sm:$0xff]
      %v2726 = vld [vmem:[%s7 + $0xc8] sm:$0xff]
      %v2727 = vld [vmem:[%s7 + $0xd0] sm:$0xff]
      %v2728 = vld [vmem:[%s7 + $0xd8] sm:$0xff]
      %v2729 = vld [vmem:[%s7 + $0xe0] sm:$0xff]
      %v2730 = vld [vmem:[%s7 + $0xe8] sm:$0xff]
      %v2731 = vld [vmem:[%s7 + $0xf0] sm:$0xff]
      %v2732 = vld [vmem:[%s7 + $0xf8] sm:$0xff]
      %v2733 = vld [vmem:[%s8] sm:$0xff]
      %v2734 = vld [vmem:[%s8 + $0x8] sm:$0xff]
      %v2735 = vld [vmem:[%s8 + $0x10] sm:$0xff]
      %v2736 = vld [vmem:[%s8 + $0x18] sm:$0xff]
      %v2737 = vld [vmem:[%s8 + $0x20] sm:$0xff]
      %v2738 = vld [vmem:[%s8 + $0x28] sm:$0xff]
      %v2739 = vld [vmem:[%s8 + $0x30] sm:$0xff]
      %v2740 = vld [vmem:[%s8 + $0x38] sm:$0xff]
      %v2741 = vld [vmem:[%s8 + $0x40] sm:$0xff]
      %v2742 = vld [vmem:[%s8 + $0x48] sm:$0xff]
      %v2743 = vld [vmem:[%s8 + $0x50] sm:$0xff]
      %v2744 = vld [vmem:[%s8 + $0x58] sm:$0xff]
      %v2745 = vld [vmem:[%s8 + $0x60] sm:$0xff]
      %v2746 = vld [vmem:[%s8 + $0x68] sm:$0xff]
      %v2747 = vld [vmem:[%s8 + $0x70] sm:$0xff]
      %v2748 = vld [vmem:[%s8 + $0x78] sm:$0xff]
      %v2749 = vld [vmem:[%s8 + $0x80] sm:$0xff]
      %v2750 = vld [vmem:[%s8 + $0x88] sm:$0xff]
      %v2751 = vld [vmem:[%s8 + $0x90] sm:$0xff]
      %v2752 = vld [vmem:[%s8 + $0x98] sm:$0xff]
      %v2753 = vld [vmem:[%s8 + $0xa0] sm:$0xff]
      %v2754 = vld [vmem:[%s8 + $0xa8] sm:$0xff]
      %v2755 = vld [vmem:[%s8 + $0xb0] sm:$0xff]
      %v2756 = vld [vmem:[%s8 + $0xb8] sm:$0xff]
      %v2757 = vld [vmem:[%s8 + $0xc0] sm:$0xff]
      %v2758 = vld [vmem:[%s8 + $0xc8] sm:$0xff]
      %v2759 = vld [vmem:[%s8 + $0xd0] sm:$0xff]
      %v2760 = vld [vmem:[%s8 + $0xd8] sm:$0xff]
      %v2761 = vld [vmem:[%s8 + $0xe0] sm:$0xff]
      %v2762 = vld [vmem:[%s8 + $0xe8] sm:$0xff]
      %v2763 = vld [vmem:[%s8 + $0xf0] sm:$0xff]
      %v2764 = vld [vmem:[%s8 + $0xf8] sm:$0xff]
      %v2765 = vpack.c.bf16 %v2670, %v2669
      %v2766 = vpack.c.bf16 %v2672, %v2671
      %v2767 = vpack.c.bf16 %v2674, %v2673
      %v2768 = vpack.c.bf16 %v2676, %v2675
      %v2769 = vpack.c.bf16 %v2678, %v2677
      %v2770 = vpack.c.bf16 %v2680, %v2679
      %v2771 = vpack.c.bf16 %v2682, %v2681
      %v2772 = vpack.c.bf16 %v2684, %v2683
      %v2773 = vpack.c.bf16 %v2686, %v2685
      %v2774 = vpack.c.bf16 %v2688, %v2687
      %v2775 = vpack.c.bf16 %v2690, %v2689
      %v2776 = vpack.c.bf16 %v2692, %v2691
      %v2777 = vpack.c.bf16 %v2694, %v2693
      %v2778 = vpack.c.bf16 %v2696, %v2695
      %v2779 = vpack.c.bf16 %v2698, %v2697
      %v2780 = vpack.c.bf16 %v2700, %v2699
      %2782 = vset.pattern.permute.xlu0 0
      %2783 = vperm.xlu0 %2782, %v2733
      %v2784 = vpop.permute.xlu0 %2783
      %2787 = vset.pattern.permute.xlu0 0
      %2788 = vperm.xlu0 %2787, %v2734
      %v2789 = vpop.permute.xlu0 %2788
      %2792 = vset.pattern.permute.xlu0 0
      %2793 = vperm.xlu0 %2792, %v2735
      %v2794 = vpop.permute.xlu0 %2793
      %2797 = vset.pattern.permute.xlu0 0
      %2798 = vperm.xlu0 %2797, %v2736
      %v2799 = vpop.permute.xlu0 %2798
      %2802 = vset.pattern.permute.xlu0 0
      %2803 = vperm.xlu0 %2802, %v2737
      %v2804 = vpop.permute.xlu0 %2803
      %2807 = vset.pattern.permute.xlu0 0
      %2808 = vperm.xlu0 %2807, %v2738
      %v2809 = vpop.permute.xlu0 %2808
      %2812 = vset.pattern.permute.xlu0 0
      %2813 = vperm.xlu0 %2812, %v2739
      %v2814 = vpop.permute.xlu0 %2813
      %2817 = vset.pattern.permute.xlu0 0
      %2818 = vperm.xlu0 %2817, %v2740
      %v2819 = vpop.permute.xlu0 %2818
      %2822 = vset.pattern.permute.xlu0 0
      %2823 = vperm.xlu0 %2822, %v2741
      %v2824 = vpop.permute.xlu0 %2823
      %2827 = vset.pattern.permute.xlu0 0
      %2828 = vperm.xlu0 %2827, %v2742
      %v2829 = vpop.permute.xlu0 %2828
      %2832 = vset.pattern.permute.xlu0 0
      %2833 = vperm.xlu0 %2832, %v2743
      %v2834 = vpop.permute.xlu0 %2833
      %2837 = vset.pattern.permute.xlu0 0
      %2838 = vperm.xlu0 %2837, %v2744
      %v2839 = vpop.permute.xlu0 %2838
      %2842 = vset.pattern.permute.xlu0 0
      %2843 = vperm.xlu0 %2842, %v2745
      %v2844 = vpop.permute.xlu0 %2843
      %2847 = vset.pattern.permute.xlu0 0
      %2848 = vperm.xlu0 %2847, %v2746
      %v2849 = vpop.permute.xlu0 %2848
      %2852 = vset.pattern.permute.xlu0 0
      %2853 = vperm.xlu0 %2852, %v2747
      %v2854 = vpop.permute.xlu0 %2853
      %2857 = vset.pattern.permute.xlu0 0
      %2858 = vperm.xlu0 %2857, %v2748
      %v2859 = vpop.permute.xlu0 %2858
      %2862 = vset.pattern.permute.xlu0 0
      %2863 = vperm.xlu0 %2862, %v2749
      %v2864 = vpop.permute.xlu0 %2863
      %2867 = vset.pattern.permute.xlu0 0
      %2868 = vperm.xlu0 %2867, %v2750
      %v2869 = vpop.permute.xlu0 %2868
      %2872 = vset.pattern.permute.xlu0 0
      %2873 = vperm.xlu0 %2872, %v2751
      %v2874 = vpop.permute.xlu0 %2873
      %2877 = vset.pattern.permute.xlu0 0
      %2878 = vperm.xlu0 %2877, %v2752
      %v2879 = vpop.permute.xlu0 %2878
      %2882 = vset.pattern.permute.xlu0 0
      %2883 = vperm.xlu0 %2882, %v2753
      %v2884 = vpop.permute.xlu0 %2883
      %2887 = vset.pattern.permute.xlu0 0
      %2888 = vperm.xlu0 %2887, %v2754
      %v2889 = vpop.permute.xlu0 %2888
      %2892 = vset.pattern.permute.xlu0 0
      %2893 = vperm.xlu0 %2892, %v2755
      %v2894 = vpop.permute.xlu0 %2893
      %2897 = vset.pattern.permute.xlu0 0
      %2898 = vperm.xlu0 %2897, %v2756
      %v2899 = vpop.permute.xlu0 %2898
      %2902 = vset.pattern.permute.xlu0 0
      %2903 = vperm.xlu0 %2902, %v2757
      %v2904 = vpop.permute.xlu0 %2903
      %2907 = vset.pattern.permute.xlu0 0
      %2908 = vperm.xlu0 %2907, %v2758
      %v2909 = vpop.permute.xlu0 %2908
      %2912 = vset.pattern.permute.xlu0 0
      %2913 = vperm.xlu0 %2912, %v2759
      %v2914 = vpop.permute.xlu0 %2913
      %2917 = vset.pattern.permute.xlu0 0
      %2918 = vperm.xlu0 %2917, %v2760
      %v2919 = vpop.permute.xlu0 %2918
      %2922 = vset.pattern.permute.xlu0 0
      %2923 = vperm.xlu0 %2922, %v2761
      %v2924 = vpop.permute.xlu0 %2923
      %2927 = vset.pattern.permute.xlu0 0
      %2928 = vperm.xlu0 %2927, %v2762
      %v2929 = vpop.permute.xlu0 %2928
      %2932 = vset.pattern.permute.xlu0 0
      %2933 = vperm.xlu0 %2932, %v2763
      %v2934 = vpop.permute.xlu0 %2933
      %2937 = vset.pattern.permute.xlu0 0
      %2938 = vperm.xlu0 %2937, %v2764
      %v2939 = vpop.permute.xlu0 %2938
      %v2973 = vunpack.c.l.b16 %v2701
      %v2974 = vunpack.c.h.b16 %v2701
      %v2975 = vunpack.c.l.b16 %v2702
      %v2976 = vunpack.c.h.b16 %v2702
      %v2977 = vunpack.c.l.b16 %v2703
      %v2978 = vunpack.c.h.b16 %v2703
      %v2979 = vunpack.c.l.b16 %v2704
      %v2980 = vunpack.c.h.b16 %v2704
      %v2981 = vunpack.c.l.b16 %v2705
      %v2982 = vunpack.c.h.b16 %v2705
      %v2983 = vunpack.c.l.b16 %v2706
      %v2984 = vunpack.c.h.b16 %v2706
      %v2985 = vunpack.c.l.b16 %v2707
      %v2986 = vunpack.c.h.b16 %v2707
      %v2987 = vunpack.c.l.b16 %v2708
      %v2988 = vunpack.c.h.b16 %v2708
      %v2989 = vunpack.c.l.b16 %v2709
      %v2990 = vunpack.c.h.b16 %v2709
      %v2991 = vunpack.c.l.b16 %v2710
      %v2992 = vunpack.c.h.b16 %v2710
      %v2993 = vunpack.c.l.b16 %v2711
      %v2994 = vunpack.c.h.b16 %v2711
      %v2995 = vunpack.c.l.b16 %v2712
      %v2996 = vunpack.c.h.b16 %v2712
      %v2997 = vunpack.c.l.b16 %v2713
      %v2998 = vunpack.c.h.b16 %v2713
      %v2999 = vunpack.c.l.b16 %v2714
      %v3000 = vunpack.c.h.b16 %v2714
      %v3001 = vunpack.c.l.b16 %v2715
      %v3002 = vunpack.c.h.b16 %v2715
      %v3003 = vunpack.c.l.b16 %v2716
      %v3004 = vunpack.c.h.b16 %v2716
      %v3005 = vunpack.c.l.b16 %v2717
      %v3006 = vunpack.c.h.b16 %v2717
      %v3007 = vunpack.c.l.b16 %v2718
      %v3008 = vunpack.c.h.b16 %v2718
      %v3009 = vunpack.c.l.b16 %v2719
      %v3010 = vunpack.c.h.b16 %v2719
      %v3011 = vunpack.c.l.b16 %v2720
      %v3012 = vunpack.c.h.b16 %v2720
      %v3013 = vunpack.c.l.b16 %v2721
      %v3014 = vunpack.c.h.b16 %v2721
      %v3015 = vunpack.c.l.b16 %v2722
      %v3016 = vunpack.c.h.b16 %v2722
      %v3017 = vunpack.c.l.b16 %v2723
      %v3018 = vunpack.c.h.b16 %v2723
      %v3019 = vunpack.c.l.b16 %v2724
      %v3020 = vunpack.c.h.b16 %v2724
      %v3021 = vunpack.c.l.b16 %v2725
      %v3022 = vunpack.c.h.b16 %v2725
      %v3023 = vunpack.c.l.b16 %v2726
      %v3024 = vunpack.c.h.b16 %v2726
      %v3025 = vunpack.c.l.b16 %v2727
      %v3026 = vunpack.c.h.b16 %v2727
      %v3027 = vunpack.c.l.b16 %v2728
      %v3028 = vunpack.c.h.b16 %v2728
      %v3029 = vunpack.c.l.b16 %v2729
      %v3030 = vunpack.c.h.b16 %v2729
      %v3031 = vunpack.c.l.b16 %v2730
      %v3032 = vunpack.c.h.b16 %v2730
      %v3033 = vunpack.c.l.b16 %v2731
      %v3034 = vunpack.c.h.b16 %v2731
      %v3035 = vunpack.c.l.b16 %v2732
      %v3036 = vunpack.c.h.b16 %v2732
      %v3037 = vpack.c.b16 %v2975, %v2973
      %v3038 = vpack.c.b16 %v2976, %v2974
      %v3039 = vpack.c.b16 %v2979, %v2977
      %v3040 = vpack.c.b16 %v2980, %v2978
      %v3041 = vpack.c.b16 %v2983, %v2981
      %v3042 = vpack.c.b16 %v2984, %v2982
      %v3043 = vpack.c.b16 %v2987, %v2985
      %v3044 = vpack.c.b16 %v2988, %v2986
      %v3045 = vpack.c.b16 %v2991, %v2989
      %v3046 = vpack.c.b16 %v2992, %v2990
      %v3047 = vpack.c.b16 %v2995, %v2993
      %v3048 = vpack.c.b16 %v2996, %v2994
      %v3049 = vpack.c.b16 %v2999, %v2997
      %v3050 = vpack.c.b16 %v3000, %v2998
      %v3051 = vpack.c.b16 %v3003, %v3001
      %v3052 = vpack.c.b16 %v3004, %v3002
      %v3053 = vpack.c.b16 %v3007, %v3005
      %v3054 = vpack.c.b16 %v3008, %v3006
      %v3055 = vpack.c.b16 %v3011, %v3009
      %v3056 = vpack.c.b16 %v3012, %v3010
      %v3057 = vpack.c.b16 %v3015, %v3013
      %v3058 = vpack.c.b16 %v3016, %v3014
      %v3059 = vpack.c.b16 %v3019, %v3017
      %v3060 = vpack.c.b16 %v3020, %v3018
      %v3061 = vpack.c.b16 %v3023, %v3021
      %v3062 = vpack.c.b16 %v3024, %v3022
      %v3063 = vpack.c.b16 %v3027, %v3025
      %v3064 = vpack.c.b16 %v3028, %v3026
      %v3065 = vpack.c.b16 %v3031, %v3029
      %v3066 = vpack.c.b16 %v3032, %v3030
      %v3067 = vpack.c.b16 %v3035, %v3033
      %v3068 = vpack.c.b16 %v3036, %v3034
      %3101 = vmatpush.bf16.msra.mxu0 %v2772
      %3102 = vmatpush.bf16.msra.mxu0 %v2771
      %3103 = vmatpush.bf16.msra.mxu0 %v2770
      %3104 = vmatpush.bf16.msra.mxu0 %v2769
      %3105 = vmatpush.bf16.msra.mxu0 %v2768
      %3106 = vmatpush.bf16.msra.mxu0 %v2767
      %3107 = vmatpush.bf16.msra.mxu0 %v2766
      %3108 = vmatpush.bf16.msra.mxu0 %v2765
      %3109 = vmatmul.bf16.gmra.mxu0 %v3037
      %v3110 = vpop.f32.mrf.mxu0
      %v3111 = vadd.f32 %v2784, %v3110
      %v3112 = vpop.f32.mrf.mxu0
      %v3113 = vadd.f32 %v2789, %v3112
      %3114 = vmatmul.bf16.gmra.mxu0 %v3039
      %v3115 = vpop.f32.mrf.mxu0
      %v3116 = vadd.f32 %v2794, %v3115
      %v3117 = vpop.f32.mrf.mxu0
      %v3118 = vadd.f32 %v2799, %v3117
      %3119 = vmatmul.bf16.gmra.mxu0 %v3041
      %v3120 = vpop.f32.mrf.mxu0
      %v3121 = vadd.f32 %v2804, %v3120
      %v3122 = vpop.f32.mrf.mxu0
      %v3123 = vadd.f32 %v2809, %v3122
      %3124 = vmatmul.bf16.gmra.mxu0 %v3043
      %v3125 = vpop.f32.mrf.mxu0
      %v3126 = vadd.f32 %v2814, %v3125
      %v3127 = vpop.f32.mrf.mxu0
      %v3128 = vadd.f32 %v2819, %v3127
      %3129 = vmatmul.bf16.gmra.mxu0 %v3045
      %v3130 = vpop.f32.mrf.mxu0
      %v3131 = vadd.f32 %v2824, %v3130
      %v3132 = vpop.f32.mrf.mxu0
      %v3133 = vadd.f32 %v2829, %v3132
      %3134 = vmatmul.bf16.gmra.mxu0 %v3047
      %v3135 = vpop.f32.mrf.mxu0
      %v3136 = vadd.f32 %v2834, %v3135
      %v3137 = vpop.f32.mrf.mxu0
      %v3138 = vadd.f32 %v2839, %v3137
      %3139 = vmatmul.bf16.gmra.mxu0 %v3049
      %v3140 = vpop.f32.mrf.mxu0
      %v3141 = vadd.f32 %v2844, %v3140
      %v3142 = vpop.f32.mrf.mxu0
      %v3143 = vadd.f32 %v2849, %v3142
      %3144 = vmatmul.bf16.gmra.mxu0 %v3051
      %v3145 = vpop.f32.mrf.mxu0
      %v3146 = vadd.f32 %v2854, %v3145
      %v3147 = vpop.f32.mrf.mxu0
      %v3148 = vadd.f32 %v2859, %v3147
      %3149 = vmatmul.bf16.gmra.mxu0 %v3053
      %v3150 = vpop.f32.mrf.mxu0
      %v3151 = vadd.f32 %v2864, %v3150
      %v3152 = vpop.f32.mrf.mxu0
      %v3153 = vadd.f32 %v2869, %v3152
      %3154 = vmatmul.bf16.gmra.mxu0 %v3055
      %v3155 = vpop.f32.mrf.mxu0
      %v3156 = vadd.f32 %v2874, %v3155
      %v3157 = vpop.f32.mrf.mxu0
      %v3158 = vadd.f32 %v2879, %v3157
      %3159 = vmatmul.bf16.gmra.mxu0 %v3057
      %v3160 = vpop.f32.mrf.mxu0
      %v3161 = vadd.f32 %v2884, %v3160
      %v3162 = vpop.f32.mrf.mxu0
      %v3163 = vadd.f32 %v2889, %v3162
      %3164 = vmatmul.bf16.gmra.mxu0 %v3059
      %v3165 = vpop.f32.mrf.mxu0
      %v3166 = vadd.f32 %v2894, %v3165
      %v3167 = vpop.f32.mrf.mxu0
      %v3168 = vadd.f32 %v2899, %v3167
      %3169 = vmatmul.bf16.gmra.mxu0 %v3061
      %v3170 = vpop.f32.mrf.mxu0
      %v3171 = vadd.f32 %v2904, %v3170
      %v3172 = vpop.f32.mrf.mxu0
      %v3173 = vadd.f32 %v2909, %v3172
      %3174 = vmatmul.bf16.gmra.mxu0 %v3063
      %v3175 = vpop.f32.mrf.mxu0
      %v3176 = vadd.f32 %v2914, %v3175
      %v3177 = vpop.f32.mrf.mxu0
      %v3178 = vadd.f32 %v2919, %v3177
      %3179 = vmatmul.bf16.gmra.mxu0 %v3065
      %v3180 = vpop.f32.mrf.mxu0
      %v3181 = vadd.f32 %v2924, %v3180
      %v3182 = vpop.f32.mrf.mxu0
      %v3183 = vadd.f32 %v2929, %v3182
      %3184 = vmatmul.bf16.gmra.mxu0 %v3067
      %v3185 = vpop.f32.mrf.mxu0
      %v3186 = vadd.f32 %v2934, %v3185
      %v3187 = vpop.f32.mrf.mxu0
      %v3188 = vadd.f32 %v2939, %v3187
      %3189 = vdwg.mxu0
      %3190 = vmatpush.bf16.msra.mxu0 %v2780
      %3191 = vmatpush.bf16.msra.mxu0 %v2779
      %3192 = vmatpush.bf16.msra.mxu0 %v2778
      %3193 = vmatpush.bf16.msra.mxu0 %v2777
      %3194 = vmatpush.bf16.msra.mxu0 %v2776
      %3195 = vmatpush.bf16.msra.mxu0 %v2775
      %3196 = vmatpush.bf16.msra.mxu0 %v2774
      %3197 = vmatpush.bf16.msra.mxu0 %v2773
      %3198 = vmatmul.bf16.gmra.mxu0 %v3038
      %v3199 = vpop.f32.mrf.mxu0
      %v3200 = vadd.f32 %v3111, %v3199
      %v3201 = vpop.f32.mrf.mxu0
      %v3202 = vadd.f32 %v3113, %v3201
      %3203 = vmatmul.bf16.gmra.mxu0 %v3040
      %v3204 = vpop.f32.mrf.mxu0
      %v3205 = vadd.f32 %v3116, %v3204
      %v3206 = vpop.f32.mrf.mxu0
      %v3207 = vadd.f32 %v3118, %v3206
      %3208 = vmatmul.bf16.gmra.mxu0 %v3042
      %v3209 = vpop.f32.mrf.mxu0
      %v3210 = vadd.f32 %v3121, %v3209
      %v3211 = vpop.f32.mrf.mxu0
      %v3212 = vadd.f32 %v3123, %v3211
      %3213 = vmatmul.bf16.gmra.mxu0 %v3044
      %v3214 = vpop.f32.mrf.mxu0
      %v3215 = vadd.f32 %v3126, %v3214
      %v3216 = vpop.f32.mrf.mxu0
      %v3217 = vadd.f32 %v3128, %v3216
      %3218 = vmatmul.bf16.gmra.mxu0 %v3046
      %v3219 = vpop.f32.mrf.mxu0
      %v3220 = vadd.f32 %v3131, %v3219
      %v3221 = vpop.f32.mrf.mxu0
      %v3222 = vadd.f32 %v3133, %v3221
      %3223 = vmatmul.bf16.gmra.mxu0 %v3048
      %v3224 = vpop.f32.mrf.mxu0
      %v3225 = vadd.f32 %v3136, %v3224
      %v3226 = vpop.f32.mrf.mxu0
      %v3227 = vadd.f32 %v3138, %v3226
      %3228 = vmatmul.bf16.gmra.mxu0 %v3050
      %v3229 = vpop.f32.mrf.mxu0
      %v3230 = vadd.f32 %v3141, %v3229
      %v3231 = vpop.f32.mrf.mxu0
      %v3232 = vadd.f32 %v3143, %v3231
      %3233 = vmatmul.bf16.gmra.mxu0 %v3052
      %v3234 = vpop.f32.mrf.mxu0
      %v3235 = vadd.f32 %v3146, %v3234
      %v3236 = vpop.f32.mrf.mxu0
      %v3237 = vadd.f32 %v3148, %v3236
      %3238 = vmatmul.bf16.gmra.mxu0 %v3054
      %v3239 = vpop.f32.mrf.mxu0
      %v3240 = vadd.f32 %v3151, %v3239
      %v3241 = vpop.f32.mrf.mxu0
      %v3242 = vadd.f32 %v3153, %v3241
      %3243 = vmatmul.bf16.gmra.mxu0 %v3056
      %v3244 = vpop.f32.mrf.mxu0
      %v3245 = vadd.f32 %v3156, %v3244
      %v3246 = vpop.f32.mrf.mxu0
      %v3247 = vadd.f32 %v3158, %v3246
      %3248 = vmatmul.bf16.gmra.mxu0 %v3058
      %v3249 = vpop.f32.mrf.mxu0
      %v3250 = vadd.f32 %v3161, %v3249
      %v3251 = vpop.f32.mrf.mxu0
      %v3252 = vadd.f32 %v3163, %v3251
      %3253 = vmatmul.bf16.gmra.mxu0 %v3060
      %v3254 = vpop.f32.mrf.mxu0
      %v3255 = vadd.f32 %v3166, %v3254
      %v3256 = vpop.f32.mrf.mxu0
      %v3257 = vadd.f32 %v3168, %v3256
      %3258 = vmatmul.bf16.gmra.mxu0 %v3062
      %v3259 = vpop.f32.mrf.mxu0
      %v3260 = vadd.f32 %v3171, %v3259
      %v3261 = vpop.f32.mrf.mxu0
      %v3262 = vadd.f32 %v3173, %v3261
      %3263 = vmatmul.bf16.gmra.mxu0 %v3064
      %v3264 = vpop.f32.mrf.mxu0
      %v3265 = vadd.f32 %v3176, %v3264
      %v3266 = vpop.f32.mrf.mxu0
      %v3267 = vadd.f32 %v3178, %v3266
      %3268 = vmatmul.bf16.gmra.mxu0 %v3066
      %v3269 = vpop.f32.mrf.mxu0
      %v3270 = vadd.f32 %v3181, %v3269
      %v3271 = vpop.f32.mrf.mxu0
      %v3272 = vadd.f32 %v3183, %v3271
      %3273 = vmatmul.bf16.gmra.mxu0 %v3068
      %v3274 = vpop.f32.mrf.mxu0
      %v3275 = vadd.f32 %v3186, %v3274
      %v3276 = vpop.f32.mrf.mxu0
      %v3277 = vadd.f32 %v3188, %v3276
      %3278 = vdwg.mxu0
      %vm3279 = vcmask 523264
      %3280 = vst.msk [vmem:[%s383] sm:$0xff] %vm3279, %v3200
      %3281 = vst.msk [vmem:[%s383 + $0x8] sm:$0xff] %vm3279, %v3202
      %3282 = vst.msk [vmem:[%s383 + $0x10] sm:$0xff] %vm3279, %v3205
      %3283 = vst.msk [vmem:[%s383 + $0x18] sm:$0xff] %vm3279, %v3207
      %3284 = vst.msk [vmem:[%s383 + $0x20] sm:$0xff] %vm3279, %v3210
      %3285 = vst.msk [vmem:[%s383 + $0x28] sm:$0xff] %vm3279, %v3212
      %3286 = vst.msk [vmem:[%s383 + $0x30] sm:$0xff] %vm3279, %v3215
      %3287 = vst.msk [vmem:[%s383 + $0x38] sm:$0xff] %vm3279, %v3217
      %3288 = vst.msk [vmem:[%s383 + $0x40] sm:$0xff] %vm3279, %v3220
      %3289 = vst.msk [vmem:[%s383 + $0x48] sm:$0xff] %vm3279, %v3222
      %3290 = vst.msk [vmem:[%s383 + $0x50] sm:$0xff] %vm3279, %v3225
      %3291 = vst.msk [vmem:[%s383 + $0x58] sm:$0xff] %vm3279, %v3227
      %3292 = vst.msk [vmem:[%s383 + $0x60] sm:$0xff] %vm3279, %v3230
      %3293 = vst.msk [vmem:[%s383 + $0x68] sm:$0xff] %vm3279, %v3232
      %3294 = vst.msk [vmem:[%s383 + $0x70] sm:$0xff] %vm3279, %v3235
      %3295 = vst.msk [vmem:[%s383 + $0x78] sm:$0xff] %vm3279, %v3237
      %3296 = vst.msk [vmem:[%s383 + $0x80] sm:$0xff] %vm3279, %v3240
      %3297 = vst.msk [vmem:[%s383 + $0x88] sm:$0xff] %vm3279, %v3242
      %3298 = vst.msk [vmem:[%s383 + $0x90] sm:$0xff] %vm3279, %v3245
      %3299 = vst.msk [vmem:[%s383 + $0x98] sm:$0xff] %vm3279, %v3247
      %3300 = vst.msk [vmem:[%s383 + $0xa0] sm:$0xff] %vm3279, %v3250
      %3301 = vst.msk [vmem:[%s383 + $0xa8] sm:$0xff] %vm3279, %v3252
      %3302 = vst.msk [vmem:[%s383 + $0xb0] sm:$0xff] %vm3279, %v3255
      %3303 = vst.msk [vmem:[%s383 + $0xb8] sm:$0xff] %vm3279, %v3257
      %3304 = vst.msk [vmem:[%s383 + $0xc0] sm:$0xff] %vm3279, %v3260
      %3305 = vst.msk [vmem:[%s383 + $0xc8] sm:$0xff] %vm3279, %v3262
      %3306 = vst.msk [vmem:[%s383 + $0xd0] sm:$0xff] %vm3279, %v3265
      %3307 = vst.msk [vmem:[%s383 + $0xd8] sm:$0xff] %vm3279, %v3267
      %3308 = vst.msk [vmem:[%s383 + $0xe0] sm:$0xff] %vm3279, %v3270
      %3309 = vst.msk [vmem:[%s383 + $0xe8] sm:$0xff] %vm3279, %v3272
      %3310 = vst.msk [vmem:[%s383 + $0xf0] sm:$0xff] %vm3279, %v3275
      %3311 = vst.msk [vmem:[%s383 + $0xf8] sm:$0xff] %vm3279, %v3277
      %p3312 = scmp.lt.s32.totalorder %s24, 1
      %s3313 = scalar_select %p3312, %s24, 1
      %p3314 = scmp.lt.s32.totalorder %s25, 0
      %s3315 = scalar_select %p3314, %s25, 0
      %s3316 = smul.addr %s3313, 32
      %s3317 = sadd.s32 %s3315, %s3316
      %s3318 = smul.addr %s3317, 8
      %s3319 = scalar_lea.vmem %s9, %s3318
      // Predicated region
      $region57: #{_lambda_.1} parent=55 // pred_check
        %p3320 = pneg %p253
      $region58: #{_lambda_.1} parent=55 // pred_check_branch
        %3322 = sbr.rel (%p3320) target = $region60
      $region59: #{_lambda_.1} parent=55 // pred_region
        _
      $region60: #{_lambda_.1} parent=55 // pred_fallthru
        _
    $region56: #{_lambda_.1} parent=5 // pred_fallthru
      _
    %p3323 = scmp.le.s32.totalorder 2, %s15
    // Predicated region
    $region61: #{_lambda_.1} parent=5 // pred_check
      %p3324 = pneg %p3323
    $region62: #{_lambda_.1} parent=5 // pred_check_branch
      %3326 = sbr.rel (%p3324) target = $region64
    $region63: #{_lambda_.1} parent=5 // pred_region
      %s3327 = ssub.s32 %s15, 2
      // Predicated region
      $region65: #{_lambda_.1} parent=63 // pred_check
        %p3328 = pneg %p259
      $region66: #{_lambda_.1} parent=63 // pred_check_branch
        %3330 = sbr.rel (%p3328) target = $region68
      $region67: #{_lambda_.1} parent=63 // pred_region
        %p3331 = scmp.lt.s32.totalorder %s26, 1
        %s3332 = scalar_select %p3331, %s26, 1
        %p3333 = scmp.lt.s32.totalorder %s27, 0
        %s3334 = scalar_select %p3333, %s27, 0
        %s3335 = smul.addr %s3332, 32
        %s3336 = sadd.s32 %s3334, %s3335
        %s3337 = smul.addr %s3336, 8
        %s3338 = scalar_lea.vmem %s9, %s3337
      $region68: #{_lambda_.1} parent=63 // pred_fallthru
        _
    $region64: #{_lambda_.1} parent=5 // pred_fallthru
      _
  $region6: #{_lambda_.1} parent=0 // loop_footer
    %s19 = sadd.s32 1, %s15
  $region7: #{_lambda_.1} parent=0 // loop_footer_branch
    %14 = sbr.rel target = $region3
  $region8: #{_lambda_.1} parent=0 // loop_exit
    _

</llo_original>
